<compile_context>
chip_gen: v6e
topology: v6e:2x2x1
jax: 0.10.0
libtpu: 0.0.40
codegen_flags: <defaults>
</compile_context>

<pallas_src>
import math

import numpy as np
import jax
import jax.numpy as jnp
from jax.experimental import pallas as pl
from jax.experimental.pallas import tpu as pltpu


# ------------------------------ Pallas kernel ------------------------------

def _make_causal_conv_kernel(nKernel, dilation, pad, tile_l):
    K, d, P, TL = nKernel, dilation, pad, tile_l

    def kernel(x_ref, w_ref, b_ref, o_ref, *scratch):
        # x_ref:   (1, Cin, TL)   current sequence tile
        # w_ref:   (K, Cout, Cin) per-tap weight matrices (VMEM resident)
        # b_ref:   (Cout, 1)
        # o_ref:   (1, Cout, TL)
        # scratch: (Cin, TL) VMEM carry of the previous tile (only if P > 0)
        cur = x_ref[0]                                          # (Cin, TL)

        if P > 0:
            (prev_ref,) = scratch
            j = pl.program_id(1)

            @pl.when(j == 0)
            def _():
                # First tile of this batch: causal zero padding.
                prev_ref[...] = jnp.zeros_like(prev_ref)

            halo = prev_ref[:, TL - P:]                         # (Cin, P)
            window = jnp.concatenate([halo, cur], axis=-1)      # (Cin, TL+P)
        else:
            window = cur

        acc = None
        for k in range(K):                                      # static unroll
            x_k = window[:, k * d: k * d + TL]                  # (Cin, TL)
            y_k = jnp.dot(w_ref[k], x_k,
                          preferred_element_type=jnp.float32,
                          precision=jax.lax.Precision.HIGHEST)  # (Cout, TL)
            acc = y_k if acc is None else acc + y_k

        o_ref[0] = (acc + b_ref[...]).astype(o_ref.dtype)

        if P > 0:
            # Carry this tile so the next grid step (same batch, j+1) can use
            # its last P columns as the causal halo.
            prev_ref[...] = cur

    return kernel


# ------------------------------ module wrapper ------------------------------

class CausalConvPallas:
    """Pallas TPU implementation of the PyTorch CausalConv module."""

    def __init__(self, inDim, outDim, nKernel, dilation=1, *, key):
        self.inDim = inDim
        self.outDim = outDim
        self.nKernel = nKernel
        self.dilation = dilation
        # torch.nn.Conv1d default init: U(-1/sqrt(fan_in), 1/sqrt(fan_in))
        fan_in = inDim * nKernel
        bound = 1.0 / math.sqrt(fan_in)
        k_w, k_b = jax.random.split(key)
        self.weight = jax.random.uniform(k_w, (outDim, inDim, nKernel),
                                         jnp.float32, minval=-bound, maxval=bound)
        self.bias = jax.random.uniform(k_b, (outDim,), jnp.float32,
                                       minval=-bound, maxval=bound)

    def forward(self, x, *, tile_l=128):
        B, Cin, L = x.shape
        assert Cin == self.inDim
        K, d, O = self.nKernel, self.dilation, self.outDim
        P = d * (K - 1)                          # causal (left) padding
        TL = int(tile_l)
        assert TL % 128 == 0, "sequence tile must be lane-aligned"
        assert P <= TL, "causal halo must fit inside one sequence tile"
        nT = -(-L // TL)
        Lr = nT * TL

        # Right-pad the sequence to a multiple of TL (tail is sliced off).
        x_p = jnp.pad(x.astype(jnp.float32),
                      ((0, 0), (0, 0), (0, Lr - L)))             # (B, Cin, Lr)
        w_taps = jnp.transpose(self.weight, (2, 0, 1))           # (K, Cout, Cin)
        b_col = self.bias.reshape(O, 1)                          # (Cout, 1)

        kernel = _make_causal_conv_kernel(K, d, P, TL)
        scratch_shapes = [pltpu.VMEM((Cin, TL), jnp.float32)] if P > 0 else []

        out = pl.pallas_call(
            kernel,
            out_shape=jax.ShapeDtypeStruct((B, O, Lr), jnp.float32),
            grid=(B, nT),
            in_specs=[
                # current sequence tile
                pl.BlockSpec((1, Cin, TL), lambda b, j: (b, 0, j)),
                # resident weights / bias (constant index -> fetched once)
                pl.BlockSpec((K, O, Cin), lambda b, j: (0, 0, 0)),
                pl.BlockSpec((O, 1), lambda b, j: (0, 0)),
            ],
            out_specs=pl.BlockSpec((1, O, TL), lambda b, j: (b, 0, j)),
            scratch_shapes=scratch_shapes,
            compiler_params=pltpu.CompilerParams(
                # batch is independent (megacore-shardable); the sequence axis
                # carries the halo scratch, so it must stay "arbitrary".
                dimension_semantics=("parallel", "arbitrary")),
        )(x_p, w_taps, b_col)

        return out[:, :, :L]                                     # (B, Cout, L)

    # Pure-JAX reference mirroring the PyTorch forward exactly.
    def reference(self, x):
        K, d = self.nKernel, self.dilation
        P = d * (K - 1)
        B, Cin, L = x.shape
        xp = jnp.pad(x, ((0, 0), (0, 0), (P, 0)))
        taps = jnp.stack([xp[:, :, k * d: k * d + L] for k in range(K)],
                         axis=2)                                 # (B, Cin, K, L)
        y = jnp.einsum("bckl,ock->bol", taps, self.weight,
                       precision=jax.lax.Precision.HIGHEST)
        return y + self.bias[None, :, None]


# ---------------------------------- main ------------------------------------

if __name__ == "__main__":
    key = jax.random.PRNGKey(0)
    k_model, k_x = jax.random.split(key)

    # small, deterministic setup
    B, Cin, L = 2, 4, 300          # batch, input channels, sequence length
    Cout, K, dilation = 8, 3, 2    # output channels, kernel size, dilation

    model = CausalConvPallas(Cin, Cout, K, dilation=dilation, key=k_model)
    x = jax.random.normal(k_x, (B, Cin, L), jnp.float32)

    out = jax.block_until_ready(model.forward(x))
    ref = model.reference(x)

    assert out.shape == (B, Cout, L), out.shape
    np.testing.assert_allclose(np.asarray(out), np.asarray(ref),
                               rtol=1e-4, atol=1e-4)
    print("KERNEL_OK")
</pallas_src>

<mosaic_0001>
module attributes {stable_mosaic.version = 11 : i64} {
  func.func @kernel(%arg0: i32, %arg1: i32, %arg2: memref<1x4x128xf32, #tpu.memory_space<vmem>>, %arg3: memref<3x8x4xf32, #tpu.memory_space<vmem>>, %arg4: memref<8x1xf32, #tpu.memory_space<vmem>>, %arg5: memref<1x8x128xf32, #tpu.memory_space<vmem>>, %arg6: memref<4x128xf32, #tpu.memory_space<vmem>>) attributes {dimension_semantics = [#tpu.dimension_semantics<parallel>, #tpu.dimension_semantics<arbitrary>], iteration_bounds = array<i64: 2, 3>, scalar_prefetch = 0 : i64, scratch_operands = 1 : i64, tpu.core_type = #tpu.core_type<tc>, window_params = [{transform_indices = @transform_0, window_bounds = array<i64: 1, 4, 128>}, {pipeline_mode = #tpu.pipeline_mode<synchronous>, transform_indices = @transform_1, window_bounds = array<i64: 3, 8, 4>}, {pipeline_mode = #tpu.pipeline_mode<synchronous>, transform_indices = @transform_2, window_bounds = array<i64: 8, 1>}, {transform_indices = @transform_3, window_bounds = array<i64: 1, 8, 128>}]} {
    %c0 = arith.constant 0 : index
    %c0_0 = arith.constant 0 : index
    %c0_1 = arith.constant 0 : index
    %0 = vector.load %arg2[%c0, %c0_0, %c0_1] : memref<1x4x128xf32, #tpu.memory_space<vmem>>, vector<1x4x128xf32>
    %1 = vector.shape_cast %0 : vector<1x4x128xf32> to vector<4x128xf32>
    %c0_i32 = arith.constant 0 : i32
    %2 = arith.cmpi eq, %arg1, %c0_i32 : i32
    %3 = arith.extui %2 : i1 to i32
    %c0_i32_2 = arith.constant 0 : i32
    %4 = arith.cmpi ne, %3, %c0_i32_2 : i32
    scf.if %4 {
      %cst_20 = arith.constant 0.000000e+00 : f32
      %28 = vector.broadcast %cst_20 : f32 to vector<4x128xf32>
      %c0_21 = arith.constant 0 : index
      %c0_22 = arith.constant 0 : index
      %29 = vector.load %arg6[%c0_21, %c0_22] : memref<4x128xf32, #tpu.memory_space<vmem>>, vector<4x128xf32>
      tpu.vector_store %arg6[%c0_21, %c0_22], %28 {strides = array<i32>} : memref<4x128xf32, #tpu.memory_space<vmem>>, vector<4x128xf32>,
    } else {
    }
    %c0_3 = arith.constant 0 : index
    %c124 = arith.constant 124 : index
    %5 = vector.load %arg6[%c0_3, %c124] : memref<4x128xf32, #tpu.memory_space<vmem>>, vector<4x4xf32>
    %6 = tpu.concatenate %5, %1 in 1 : vector<4x4xf32>, vector<4x128xf32> -> vector<4x132xf32>
    %7 = vector.extract_strided_slice %6 {offsets = [0, 0], sizes = [4, 128], strides = [1, 1]} : vector<4x132xf32> to vector<4x128xf32>
    %c0_4 = arith.constant 0 : index
    %c0_5 = arith.constant 0 : index
    %c0_6 = arith.constant 0 : index
    %8 = vector.load %arg3[%c0_4, %c0_5, %c0_6] : memref<3x8x4xf32, #tpu.memory_space<vmem>>, vector<1x8x4xf32>
    %9 = vector.shape_cast %8 : vector<1x8x4xf32> to vector<8x4xf32>
    %cst = arith.constant dense<0.000000e+00> : vector<8x128xf32>
    %10 = tpu.matmul %9, %7, %cst {dimension_numbers = #tpu.dot_dimension_numbers<[1], [0], [0], [1], [0, 0, 1, 1], [], []>, precision = #tpu.contract_precision<fp32>} : vector<8x4xf32>, vector<4x128xf32>, vector<8x128xf32> -> vector<8x128xf32>
    %11 = vector.extract_strided_slice %6 {offsets = [0, 2], sizes = [4, 128], strides = [1, 1]} : vector<4x132xf32> to vector<4x128xf32>
    %c1 = arith.constant 1 : index
    %c0_7 = arith.constant 0 : index
    %c0_8 = arith.constant 0 : index
    %12 = vector.load %arg3[%c1, %c0_7, %c0_8] : memref<3x8x4xf32, #tpu.memory_space<vmem>>, vector<1x8x4xf32>
    %13 = vector.shape_cast %12 : vector<1x8x4xf32> to vector<8x4xf32>
    %cst_9 = arith.constant dense<0.000000e+00> : vector<8x128xf32>
    %14 = tpu.matmul %13, %11, %cst_9 {dimension_numbers = #tpu.dot_dimension_numbers<[1], [0], [0], [1], [0, 0, 1, 1], [], []>, precision = #tpu.contract_precision<fp32>} : vector<8x4xf32>, vector<4x128xf32>, vector<8x128xf32> -> vector<8x128xf32>
    %15 = arith.addf %10, %14 : vector<8x128xf32>
    %16 = vector.extract_strided_slice %6 {offsets = [0, 4], sizes = [4, 128], strides = [1, 1]} : vector<4x132xf32> to vector<4x128xf32>
    %c2 = arith.constant 2 : index
    %c0_10 = arith.constant 0 : index
    %c0_11 = arith.constant 0 : index
    %17 = vector.load %arg3[%c2, %c0_10, %c0_11] : memref<3x8x4xf32, #tpu.memory_space<vmem>>, vector<1x8x4xf32>
    %18 = vector.shape_cast %17 : vector<1x8x4xf32> to vector<8x4xf32>
    %cst_12 = arith.constant dense<0.000000e+00> : vector<8x128xf32>
    %19 = tpu.matmul %18, %16, %cst_12 {dimension_numbers = #tpu.dot_dimension_numbers<[1], [0], [0], [1], [0, 0, 1, 1], [], []>, precision = #tpu.contract_precision<fp32>} : vector<8x4xf32>, vector<4x128xf32>, vector<8x128xf32> -> vector<8x128xf32>
    %20 = arith.addf %15, %19 : vector<8x128xf32>
    %c0_13 = arith.constant 0 : index
    %c0_14 = arith.constant 0 : index
    %21 = vector.load %arg4[%c0_13, %c0_14] : memref<8x1xf32, #tpu.memory_space<vmem>>, vector<8x1xf32>
    %22 = vector.broadcast %21 : vector<8x1xf32> to vector<8x128xf32>
    %23 = arith.addf %20, %22 : vector<8x128xf32>
    %c0_15 = arith.constant 0 : index
    %c0_16 = arith.constant 0 : index
    %c0_17 = arith.constant 0 : index
    %24 = vector.load %arg5[%c0_15, %c0_16, %c0_17] : memref<1x8x128xf32, #tpu.memory_space<vmem>>, vector<1x8x128xf32>
    %25 = vector.shape_cast %24 : vector<1x8x128xf32> to vector<8x128xf32>
    %26 = vector.shape_cast %23 : vector<8x128xf32> to vector<1x8x128xf32>
    tpu.vector_store %arg5[%c0_15, %c0_16, %c0_17], %26 {strides = array<i32>} : memref<1x8x128xf32, #tpu.memory_space<vmem>>, vector<1x8x128xf32>,
    %c0_18 = arith.constant 0 : index
    %c0_19 = arith.constant 0 : index
    %27 = vector.load %arg6[%c0_18, %c0_19] : memref<4x128xf32, #tpu.memory_space<vmem>>, vector<4x128xf32>
    tpu.vector_store %arg6[%c0_18, %c0_19], %1 {strides = array<i32>} : memref<4x128xf32, #tpu.memory_space<vmem>>, vector<4x128xf32>,
    return
  }
  func.func @transform_0(%arg0: i32, %arg1: i32) -> (i32, i32, i32) {
    %c0_i32 = arith.constant 0 : i32
    %c0_i32_0 = arith.constant 0 : i32
    return %arg0, %c0_i32, %arg1 : i32, i32, i32
  }
  func.func @transform_1(%arg0: i32, %arg1: i32) -> (i32, i32, i32) {
    %c0_i32 = arith.constant 0 : i32
    %c0_i32_0 = arith.constant 0 : i32
    %c0_i32_1 = arith.constant 0 : i32
    %c0_i32_2 = arith.constant 0 : i32
    return %c0_i32, %c0_i32_0, %c0_i32_1 : i32, i32, i32
  }
  func.func @transform_2(%arg0: i32, %arg1: i32) -> (i32, i32) {
    %c0_i32 = arith.constant 0 : i32
    %c0_i32_0 = arith.constant 0 : i32
    %c0_i32_1 = arith.constant 0 : i32
    return %c0_i32, %c0_i32_0 : i32, i32
  }
  func.func @transform_3(%arg0: i32, %arg1: i32) -> (i32, i32, i32) {
    %c0_i32 = arith.constant 0 : i32
    %c0_i32_0 = arith.constant 0 : i32
    return %arg0, %c0_i32, %arg1 : i32, i32, i32
  }
}

</mosaic_0001>

<llo_original>
// kernel: tpu_custom_call.1
$region0: #{tpu_custom_call.1}
  #allocation0 [shape = 'u32[]', space=smem, size = 0x4, offset = 0x4, fixed_abs, tag = 'smem constant byte address 0x4 - core index']
  #allocation1 [shape = 'u32[144,128]{1,0:T(1,128)}', space=vmem, size = 0x12000, scoped, tag = 'internal scratch']
  #allocation2 [shape = 'f32[4,128]{1,0:T(4,128)}', space=vmem, size = 0x800, scoped, tag = 'scratch operand']
  %s0 = inlined_call_operand.vmem [shape: f32[2,4,384], index: 0, kind: input, shape index: {}]
  %s1 = inlined_call_operand.vmem [shape: f32[3,8,4], index: 1, kind: input, shape index: {}]
  %s2 = inlined_call_operand.vmem [shape: f32[8,1], index: 2, kind: input, shape index: {}]
  %s3 = inlined_call_operand.hbm [shape: f32[2,8,384], index: 3, kind: output, shape index: {}]
  %s4 = sld [smem:[#allocation0]]
  $region49: #{tpu_custom_call.1} parent=0
    _
  %s6 = ssub.s32 1, %s4
  %s7 = scalar_select 0, %s6, %s4
  $region1: #{tpu_custom_call.1} parent=0
    #allocation3 [shape = 'u8[8192]{0}', space=vmem, size = 0x2000, scoped, tag = 'output window, operand 0']
    #allocation4 [shape = 's32[2]{0}', space=sflag, size = 0x8, scoped, tag = 'scoped memory for tpu_custom_call.1']
    %8 = vsyncpa [#allocation4], 0
    %s9 = scalar_lea.sflag [#allocation4], 1
    %10 = vsyncpa %s9, 0
    loop: start=0, step=1, limit=8
    $region2: #{tpu_custom_call.1} parent=1 // loop_pre_header
      _
    $region3: #{tpu_custom_call.1} parent=1 // loop_header
      %s12 = sphi 0, %s16
      %p13 = scmp.ge.s32.totalorder %s12, 8
      %s19 = sphi 0, %s31
      %s20 = sphi 0, %s27
      %s21 = sphi 0, %s19
      %s22 = sphi 0, %s20
      %s23 = sphi 0, %s21
      %s24 = sphi 0, %s22
      %s36 = sphi 0, %s38
      %s39 = sphi 0, %s36
      %s40 = sphi 0, %s39
      %s56 = sphi 0, %s40
      %s60 = sphi 0, %s60
      %s62 = sphi 0, %s60
      %s63 = sphi 0, %s62
      %s77 = sphi 0, %s63
      %s81 = sphi 0, %s81
      %s83 = sphi 0, %s81
      %s84 = sphi 0, %s83
      %s98 = sphi 0, %s84
      %s106 = sphi 0, %s108
      %s109 = sphi 0, %s106
      %s110 = sphi 0, %s109
      %s126 = sphi 0, %s110
    $region4: #{tpu_custom_call.1} parent=1 // loop_header_branch
      %15 = sbr.rel (%p13) target = $region8
    $region5: #{tpu_custom_call.1} parent=1 // loop_body
      %s17 = ssub.s32 %s12, 1
      %s18 = ssub.s32 %s12, 2
      %s25 = sadd.s32 1, %s20
      %p26 = scmp.ge.s32.totalorder %s25, 3
      %s27 = scalar_select %p26, 0, %s25
      %s28 = sadd.s32 1, %s19
      %s29 = scalar_select %p26, %s28, %s19
      %p30 = scmp.ge.s32.totalorder %s29, 2
      %s31 = scalar_select %p30, 0, %s29
      %s32 = ssub.s32 %s19, %s31
      %s33 = ssub.s32 %s20, %s27
      %s34 = sor.u32 %s32, %s33
      %p35 = scmp.eq.s32.totalorder %s34, 0
      %s37 = sadd.s32 %s36, 1
      %s38 = scalar_select %p35, %s36, %s37
      %p41 = pneg %p35
      %p42 = scmp.eq.s32.totalorder %s12, 5
      %p43 = por %p41, %p42
      %p44 = scmp.ne.s32.totalorder %s36, %s39
      %p45 = scmp.eq.s32.totalorder %s12, 0
      %p46 = por %p44, %p45
      %p47 = scmp.ne.s32.totalorder %s36, %s39
      %p48 = scmp.eq.s32.totalorder %s17, 5
      %p49 = por %p47, %p48
      %p50 = scmp.ne.s32.totalorder %s39, %s40
      %p51 = scmp.eq.s32.totalorder %s17, 0
      %p52 = por %p50, %p51
      %p53 = scmp.ne.s32.totalorder %s39, %s40
      %p54 = scmp.eq.s32.totalorder %s18, 5
      %p55 = por %p53, %p54
      %p57 = scmp.ne.s32.totalorder %s40, %s56
      %p58 = scmp.eq.s32.totalorder %s18, 0
      %p59 = por %p57, %p58
      %s61 = sadd.s32 %s60, 1
      %p64 = scmp.eq.s32.totalorder %s12, 5
      %p65 = scmp.ne.s32.totalorder %s60, %s62
      %p66 = scmp.eq.s32.totalorder %s12, 0
      %p67 = por %p65, %p66
      %p68 = scmp.ne.s32.totalorder %s60, %s62
      %p69 = scmp.eq.s32.totalorder %s17, 5
      %p70 = por %p68, %p69
      %p71 = scmp.ne.s32.totalorder %s62, %s63
      %p72 = scmp.eq.s32.totalorder %s17, 0
      %p73 = por %p71, %p72
      %p74 = scmp.ne.s32.totalorder %s62, %s63
      %p75 = scmp.eq.s32.totalorder %s18, 5
      %p76 = por %p74, %p75
      %p78 = scmp.ne.s32.totalorder %s63, %s77
      %p79 = scmp.eq.s32.totalorder %s18, 0
      %p80 = por %p78, %p79
      %s82 = sadd.s32 %s81, 1
      %p85 = scmp.eq.s32.totalorder %s12, 5
      %p86 = scmp.ne.s32.totalorder %s81, %s83
      %p87 = scmp.eq.s32.totalorder %s12, 0
      %p88 = por %p86, %p87
      %p89 = scmp.ne.s32.totalorder %s81, %s83
      %p90 = scmp.eq.s32.totalorder %s17, 5
      %p91 = por %p89, %p90
      %p92 = scmp.ne.s32.totalorder %s83, %s84
      %p93 = scmp.eq.s32.totalorder %s17, 0
      %p94 = por %p92, %p93
      %p95 = scmp.ne.s32.totalorder %s83, %s84
      %p96 = scmp.eq.s32.totalorder %s18, 5
      %p97 = por %p95, %p96
      %p99 = scmp.ne.s32.totalorder %s84, %s98
      %p100 = scmp.eq.s32.totalorder %s18, 0
      %p101 = por %p99, %p100
      %s102 = ssub.s32 %s19, %s31
      %s103 = ssub.s32 %s20, %s27
      %s104 = sor.u32 %s102, %s103
      %p105 = scmp.eq.s32.totalorder %s104, 0
      %s107 = sadd.s32 %s106, 1
      %s108 = scalar_select %p105, %s106, %s107
      %p111 = pneg %p105
      %p112 = scmp.eq.s32.totalorder %s12, 5
      %p113 = por %p111, %p112
      %p114 = scmp.ne.s32.totalorder %s106, %s109
      %p115 = scmp.eq.s32.totalorder %s12, 0
      %p116 = por %p114, %p115
      %p117 = scmp.ne.s32.totalorder %s106, %s109
      %p118 = scmp.eq.s32.totalorder %s17, 5
      %p119 = por %p117, %p118
      %p120 = scmp.ne.s32.totalorder %s109, %s110
      %p121 = scmp.eq.s32.totalorder %s17, 0
      %p122 = por %p120, %p121
      %p123 = scmp.ne.s32.totalorder %s109, %s110
      %p124 = scmp.eq.s32.totalorder %s18, 5
      %p125 = por %p123, %p124
      %p127 = scmp.ne.s32.totalorder %s110, %s126
      %p128 = scmp.eq.s32.totalorder %s18, 0
      %p129 = por %p127, %p128
      %p130 = scmp.le.s32.totalorder 1, %s12
      %p131 = scmp.lt.s32.totalorder %s12, 7
      %p132 = pnand %p130, %p131
      %p133 = pneg %p132
      // Predicated region
      $region9: #{tpu_custom_call.1} parent=5 // pred_check
        _
      $region10: #{tpu_custom_call.1} parent=5 // pred_check_branch
        %135 = sbr.rel (%p132) target = $region12
      $region11: #{tpu_custom_call.1} parent=5 // pred_region
        %s136 = ssub.s32 %s12, 1
        // Predicated region
        $region13: #{tpu_custom_call.1} parent=11 // pred_check
          %p137 = pneg %p73
        $region14: #{tpu_custom_call.1} parent=11 // pred_check_branch
          %139 = sbr.rel (%p137) target = $region16
        $region15: #{tpu_custom_call.1} parent=11 // pred_region
          _
        $region16: #{tpu_custom_call.1} parent=11 // pred_fallthru
          _
        // Predicated region
        $region17: #{tpu_custom_call.1} parent=11 // pred_check
          %p140 = pneg %p94
        $region18: #{tpu_custom_call.1} parent=11 // pred_check_branch
          %142 = sbr.rel (%p140) target = $region20
        $region19: #{tpu_custom_call.1} parent=11 // pred_region
          _
        $region20: #{tpu_custom_call.1} parent=11 // pred_fallthru
          _
      $region12: #{tpu_custom_call.1} parent=5 // pred_fallthru
        _
      %p143 = scmp.lt.s32.totalorder %s12, 6
      // Predicated region
      $region21: #{tpu_custom_call.1} parent=5 // pred_check
        %p144 = pneg %p143
      $region22: #{tpu_custom_call.1} parent=5 // pred_check_branch
        %146 = sbr.rel (%p144) target = $region24
      $region23: #{tpu_custom_call.1} parent=5 // pred_region
        // Predicated region
        $region25: #{tpu_custom_call.1} parent=23 // pred_check
          %p147 = pneg %p46
        $region26: #{tpu_custom_call.1} parent=23 // pred_check_branch
          %149 = sbr.rel (%p147) target = $region28
        $region27: #{tpu_custom_call.1} parent=23 // pred_region
          %p150 = scmp.lt.s32.totalorder %s19, 1
          %s151 = scalar_select %p150, %s19, 1
          %p152 = scmp.lt.s32.totalorder %s20, 2
          %s153 = scalar_select %p152, %s20, 2
          %s154 = smul.addr %s151, 3
          %s155 = sadd.s32 %s153, %s154
          %s156 = smul.addr %s155, 4
          %s157 = scalar_lea.vmem %s0, %s156
        $region28: #{tpu_custom_call.1} parent=23 // pred_fallthru
          _
      $region24: #{tpu_custom_call.1} parent=5 // pred_fallthru
        _
      %p158 = scmp.le.s32.totalorder 1, %s12
      %p159 = scmp.lt.s32.totalorder %s12, 7
      %p160 = pnand %p158, %p159
      %p161 = pneg %p160
      // Predicated region
      $region29: #{tpu_custom_call.1} parent=5 // pred_check
        _
      $region30: #{tpu_custom_call.1} parent=5 // pred_check_branch
        %163 = sbr.rel (%p160) target = $region32
      $region31: #{tpu_custom_call.1} parent=5 // pred_region
        %s164 = ssub.s32 %s12, 1
        %p165 = scmp.lt.s32.totalorder %s21, 1
        %s166 = scalar_select %p165, %s21, 1
        %p167 = scmp.lt.s32.totalorder %s22, 2
        %s168 = scalar_select %p167, %s22, 2
        %s169 = smul.addr %s166, 3
        %s170 = sadd.s32 %s168, %s169
        %s171 = smul.addr %s170, 4
        %s172 = scalar_lea.vmem %s0, %s171
        %p173 = pneg %p52
        %p174 = pneg %p49
        %p175 = pneg %p73
        %p176 = pneg %p70
        %p177 = pneg %p94
        %p178 = pneg %p91
        %p179 = pneg %p122
        %p180 = pneg %p119
        %s181 = sand.u32 %s109, 1
        %s182 = scalar_lea.sflag [#allocation4], %s181
        %s183 = sand.u32 %s109, 1
        %s184 = smul.addr %s183, 8
        %s185 = scalar_lea.vmem [#allocation3], %s184
        %p186 = scmp.lt.s32.totalorder %s21, 1
        %s187 = scalar_select %p186, %s21, 1
        %p188 = scmp.lt.s32.totalorder %s22, 2
        %s189 = scalar_select %p188, %s22, 2
        %s190 = smul.addr %s187, 3
        %s191 = sadd.s32 %s189, %s190
        %s192 = smul.addr %s191, 4
        %s193 = scalar_lea.vmem %s0, %s192
        %v194 = vld [vmem:[%s193] sm:$0xf]
        %p195 = scmp.eq.s32.totalorder %s22, 0
        // Predicated region
        $region33: #{tpu_custom_call.1} parent=31 // pred_check
          %p196 = pneg %p195
        $region34: #{tpu_custom_call.1} parent=31 // pred_check_branch
          %198 = sbr.rel (%p196) target = $region36
        $region35: #{tpu_custom_call.1} parent=31 // pred_region
          %199 = vst [vmem:[#allocation2] sm:$0xf] 0.0
        $region36: #{tpu_custom_call.1} parent=31 // pred_fallthru
          _
        %v200 = vld [vmem:[#allocation2] sm:$0xf]
        %202 = vrot.lane.b32.xlu0 %v200, 4
        %v203 = vpop.permute.xlu0 %202
        %206 = vrot.lane.b32.xlu0 %v194, 4
        %v207 = vpop.permute.xlu0 %206
        %vm209 = vcmask 31744
        %v210 = vsel %vm209, %v203, %v207
        %v211 = vld [vmem:[%s1] sm:$0xff]
        %s212 = scalar_lea.vmem %s1, 8
        %v213 = vld [vmem:[%s212] sm:$0xff]
        %215 = vrot.lane.b32.xlu0 %v210, 126
        %v216 = vpop.permute.xlu0 %215
        %217 = vrot.lane.b32.xlu0 %v207, 126
        %v218 = vpop.permute.xlu0 %217
        %vm219 = vcmask 1031168
        %v220 = vsel %vm219, %v216, %v218
        %v222 = vsel %vm209, %v213, 0
        %vm224 = vcmask 1043456
        %v225 = vsel %vm224, %v220, 0
        %227 = vmatprep.subr.mxu0 0.0
        %228 = vmatpush1.msra.mxu0 0.0
        %229 = vmatprep.subr.mxu0 0.0
        %230 = vmatpush1.msra.mxu0 0.0
        %231 = vmatprep.subr.mxu0 0.0
        %232 = vmatpush1.msra.mxu0 0.0
        %233 = vmatprep.subr.mxu0 0.0
        %234 = vmatpush1.msra.mxu0 0.0
        %235 = vmatprep.subr.mxu0 0.0
        %236 = vmatpush1.msra.mxu0 0.0
        %237 = vmatprep.subr.mxu0 0.0
        %238 = vmatpush1.msra.mxu0 0.0
        %239 = vmatprep.subr.mxu0 0.0
        %240 = vmatpush1.msra.mxu0 0.0
        %241 = vmatprep.subr.mxu0 0.0
        %242 = vmatpush1.msra.mxu0 0.0
        %243 = vmatprep.subr.mxu0 0.0
        %244 = vmatpush1.msra.mxu0 0.0
        %245 = vmatprep.subr.mxu0 0.0
        %246 = vmatpush1.msra.mxu0 0.0
        %247 = vmatprep.subr.mxu0 0.0
        %248 = vmatpush1.msra.mxu0 0.0
        %249 = vmatprep.subr.mxu0 0.0
        %250 = vmatpush1.msra.mxu0 0.0
        %251 = vmatprep.subr.mxu0 0.0
        %252 = vmatpush1.msra.mxu0 0.0
        %253 = vmatprep.subr.mxu0 0.0
        %254 = vmatpush1.msra.mxu0 0.0
        %255 = vmatprep.subr.mxu0 0.0
        %256 = vmatpush1.msra.mxu0 0.0
        %257 = vmatprep.subr.mxu0 0.0
        %v258 = vand.u32 %v225, 4294901760
        %259 = vmatpush1.msra.mxu0 %v258
        %260 = vmatprep.subr.mxu0 0.0
        %261 = vmatpush2.msra.mxu0 0.0
        %262 = vmatprep.subr.mxu0 0.0
        %263 = vmatpush2.msra.mxu0 0.0
        %264 = vmatprep.subr.mxu0 0.0
        %265 = vmatpush2.msra.mxu0 0.0
        %266 = vmatprep.subr.mxu0 0.0
        %267 = vmatpush2.msra.mxu0 0.0
        %268 = vmatprep.subr.mxu0 0.0
        %269 = vmatpush2.msra.mxu0 0.0
        %270 = vmatprep.subr.mxu0 0.0
        %271 = vmatpush2.msra.mxu0 0.0
        %272 = vmatprep.subr.mxu0 0.0
        %273 = vmatpush2.msra.mxu0 0.0
        %274 = vmatprep.subr.mxu0 0.0
        %275 = vmatpush2.msra.mxu0 0.0
        %276 = vmatprep.subr.mxu0 0.0
        %277 = vmatpush2.msra.mxu0 0.0
        %278 = vmatprep.subr.mxu0 0.0
        %279 = vmatpush2.msra.mxu0 0.0
        %280 = vmatprep.subr.mxu0 0.0
        %281 = vmatpush2.msra.mxu0 0.0
        %282 = vmatprep.subr.mxu0 0.0
        %283 = vmatpush2.msra.mxu0 0.0
        %284 = vmatprep.subr.mxu0 0.0
        %285 = vmatpush2.msra.mxu0 0.0
        %286 = vmatprep.subr.mxu0 0.0
        %287 = vmatpush2.msra.mxu0 0.0
        %288 = vmatprep.subr.mxu0 0.0
        %289 = vmatpush2.msra.mxu0 0.0
        %290 = vmatprep.subr.mxu0 0.0
        %291 = vmatpush2.msra.mxu0 0.0
        %292 = vmatprep.mubr.f32.mxu0 0.0
        %v293 = vand.u32 %v222, 4294901760
        %v294 = vsub.f32 %v222, %v293
        %v295 = vand.u32 %v294, 4294901760
        %v296 = vsub.f32 %v294, %v295
        %v297 = vand.u32 %v296, 4294901760
        %298 = vmatmul.mubr.f32.gmra.mxu0 %v297
        %v299 = vpop.f32.mrf.mxu0
        %v300 = vadd.f32 0.0, %v299
        %v301 = vpop.f32.mrf.mxu0
        %302 = vdwg.mxu0
        %303 = vmatprep.subr.mxu0 0.0
        %304 = vmatpush1.msra.mxu0 0.0
        %305 = vmatprep.subr.mxu0 0.0
        %306 = vmatpush1.msra.mxu0 0.0
        %307 = vmatprep.subr.mxu0 0.0
        %308 = vmatpush1.msra.mxu0 0.0
        %309 = vmatprep.subr.mxu0 0.0
        %310 = vmatpush1.msra.mxu0 0.0
        %311 = vmatprep.subr.mxu0 0.0
        %312 = vmatpush1.msra.mxu0 0.0
        %313 = vmatprep.subr.mxu0 0.0
        %314 = vmatpush1.msra.mxu0 0.0
        %315 = vmatprep.subr.mxu0 0.0
        %316 = vmatpush1.msra.mxu0 0.0
        %317 = vmatprep.subr.mxu0 0.0
        %318 = vmatpush1.msra.mxu0 0.0
        %319 = vmatprep.subr.mxu0 0.0
        %320 = vmatpush1.msra.mxu0 0.0
        %321 = vmatprep.subr.mxu0 0.0
        %322 = vmatpush1.msra.mxu0 0.0
        %323 = vmatprep.subr.mxu0 0.0
        %324 = vmatpush1.msra.mxu0 0.0
        %325 = vmatprep.subr.mxu0 0.0
        %326 = vmatpush1.msra.mxu0 0.0
        %327 = vmatprep.subr.mxu0 0.0
        %328 = vmatpush1.msra.mxu0 0.0
        %329 = vmatprep.subr.mxu0 0.0
        %330 = vmatpush1.msra.mxu0 0.0
        %331 = vmatprep.subr.mxu0 0.0
        %332 = vmatpush1.msra.mxu0 0.0
        %333 = vmatprep.subr.mxu0 0.0
        %v334 = vand.u32 %v225, 4294901760
        %v335 = vsub.f32 %v225, %v334
        %v336 = vand.u32 %v335, 4294901760
        %v337 = vsub.f32 %v335, %v336
        %v338 = vand.u32 %v337, 4294901760
        %339 = vmatpush1.msra.mxu0 %v338
        %340 = vmatprep.subr.mxu0 0.0
        %341 = vmatpush2.msra.mxu0 0.0
        %342 = vmatprep.subr.mxu0 0.0
        %343 = vmatpush2.msra.mxu0 0.0
        %344 = vmatprep.subr.mxu0 0.0
        %345 = vmatpush2.msra.mxu0 0.0
        %346 = vmatprep.subr.mxu0 0.0
        %347 = vmatpush2.msra.mxu0 0.0
        %348 = vmatprep.subr.mxu0 0.0
        %349 = vmatpush2.msra.mxu0 0.0
        %350 = vmatprep.subr.mxu0 0.0
        %351 = vmatpush2.msra.mxu0 0.0
        %352 = vmatprep.subr.mxu0 0.0
        %353 = vmatpush2.msra.mxu0 0.0
        %354 = vmatprep.subr.mxu0 0.0
        %355 = vmatpush2.msra.mxu0 0.0
        %356 = vmatprep.subr.mxu0 0.0
        %357 = vmatpush2.msra.mxu0 0.0
        %358 = vmatprep.subr.mxu0 0.0
        %359 = vmatpush2.msra.mxu0 0.0
        %360 = vmatprep.subr.mxu0 0.0
        %361 = vmatpush2.msra.mxu0 0.0
        %362 = vmatprep.subr.mxu0 0.0
        %363 = vmatpush2.msra.mxu0 0.0
        %364 = vmatprep.subr.mxu0 0.0
        %365 = vmatpush2.msra.mxu0 0.0
        %366 = vmatprep.subr.mxu0 0.0
        %367 = vmatpush2.msra.mxu0 0.0
        %368 = vmatprep.subr.mxu0 0.0
        %369 = vmatpush2.msra.mxu0 0.0
        %370 = vmatprep.subr.mxu0 0.0
        %371 = vmatpush2.msra.mxu0 0.0
        %372 = vmatprep.mubr.f32.mxu0 0.0
        %v373 = vand.u32 %v222, 4294901760
        %374 = vmatmul.mubr.f32.gmra.mxu0 %v373
        %v375 = vpop.f32.mrf.mxu0
        %v376 = vadd.f32 %v300, %v375
        %v377 = vpop.f32.mrf.mxu0
        %378 = vdwg.mxu0
        %379 = vmatprep.subr.mxu0 0.0
        %380 = vmatpush1.msra.mxu0 0.0
        %381 = vmatprep.subr.mxu0 0.0
        %382 = vmatpush1.msra.mxu0 0.0
        %383 = vmatprep.subr.mxu0 0.0
        %384 = vmatpush1.msra.mxu0 0.0
        %385 = vmatprep.subr.mxu0 0.0
        %386 = vmatpush1.msra.mxu0 0.0
        %387 = vmatprep.subr.mxu0 0.0
        %388 = vmatpush1.msra.mxu0 0.0
        %389 = vmatprep.subr.mxu0 0.0
        %390 = vmatpush1.msra.mxu0 0.0
        %391 = vmatprep.subr.mxu0 0.0
        %392 = vmatpush1.msra.mxu0 0.0
        %393 = vmatprep.subr.mxu0 0.0
        %394 = vmatpush1.msra.mxu0 0.0
        %395 = vmatprep.subr.mxu0 0.0
        %396 = vmatpush1.msra.mxu0 0.0
        %397 = vmatprep.subr.mxu0 0.0
        %398 = vmatpush1.msra.mxu0 0.0
        %399 = vmatprep.subr.mxu0 0.0
        %400 = vmatpush1.msra.mxu0 0.0
        %401 = vmatprep.subr.mxu0 0.0
        %402 = vmatpush1.msra.mxu0 0.0
        %403 = vmatprep.subr.mxu0 0.0
        %404 = vmatpush1.msra.mxu0 0.0
        %405 = vmatprep.subr.mxu0 0.0
        %406 = vmatpush1.msra.mxu0 0.0
        %407 = vmatprep.subr.mxu0 0.0
        %408 = vmatpush1.msra.mxu0 0.0
        %409 = vmatprep.subr.mxu0 0.0
        %v410 = vand.u32 %v225, 4294901760
        %v411 = vsub.f32 %v225, %v410
        %412 = vmatpush1.msra.mxu0 %v411
        %413 = vmatprep.subr.mxu0 0.0
        %414 = vmatpush2.msra.mxu0 0.0
        %415 = vmatprep.subr.mxu0 0.0
        %416 = vmatpush2.msra.mxu0 0.0
        %417 = vmatprep.subr.mxu0 0.0
        %418 = vmatpush2.msra.mxu0 0.0
        %419 = vmatprep.subr.mxu0 0.0
        %420 = vmatpush2.msra.mxu0 0.0
        %421 = vmatprep.subr.mxu0 0.0
        %422 = vmatpush2.msra.mxu0 0.0
        %423 = vmatprep.subr.mxu0 0.0
        %424 = vmatpush2.msra.mxu0 0.0
        %425 = vmatprep.subr.mxu0 0.0
        %426 = vmatpush2.msra.mxu0 0.0
        %427 = vmatprep.subr.mxu0 0.0
        %428 = vmatpush2.msra.mxu0 0.0
        %429 = vmatprep.subr.mxu0 0.0
        %430 = vmatpush2.msra.mxu0 0.0
        %431 = vmatprep.subr.mxu0 0.0
        %432 = vmatpush2.msra.mxu0 0.0
        %433 = vmatprep.subr.mxu0 0.0
        %434 = vmatpush2.msra.mxu0 0.0
        %435 = vmatprep.subr.mxu0 0.0
        %436 = vmatpush2.msra.mxu0 0.0
        %437 = vmatprep.subr.mxu0 0.0
        %438 = vmatpush2.msra.mxu0 0.0
        %439 = vmatprep.subr.mxu0 0.0
        %440 = vmatpush2.msra.mxu0 0.0
        %441 = vmatprep.subr.mxu0 0.0
        %442 = vmatpush2.msra.mxu0 0.0
        %443 = vmatprep.subr.mxu0 0.0
        %444 = vmatpush2.msra.mxu0 0.0
        %445 = vmatprep.mubr.f32.mxu0 0.0
        %v446 = vand.u32 %v222, 4294901760
        %v447 = vsub.f32 %v222, %v446
        %448 = vmatmul.mubr.f32.gmra.mxu0 %v447
        %v449 = vpop.f32.mrf.mxu0
        %v450 = vadd.f32 %v376, %v449
        %v451 = vpop.f32.mrf.mxu0
        %452 = vdwg.mxu0
        %453 = vmatprep.subr.mxu0 0.0
        %454 = vmatpush1.msra.mxu0 0.0
        %455 = vmatprep.subr.mxu0 0.0
        %456 = vmatpush1.msra.mxu0 0.0
        %457 = vmatprep.subr.mxu0 0.0
        %458 = vmatpush1.msra.mxu0 0.0
        %459 = vmatprep.subr.mxu0 0.0
        %460 = vmatpush1.msra.mxu0 0.0
        %461 = vmatprep.subr.mxu0 0.0
        %462 = vmatpush1.msra.mxu0 0.0
        %463 = vmatprep.subr.mxu0 0.0
        %464 = vmatpush1.msra.mxu0 0.0
        %465 = vmatprep.subr.mxu0 0.0
        %466 = vmatpush1.msra.mxu0 0.0
        %467 = vmatprep.subr.mxu0 0.0
        %468 = vmatpush1.msra.mxu0 0.0
        %469 = vmatprep.subr.mxu0 0.0
        %470 = vmatpush1.msra.mxu0 0.0
        %471 = vmatprep.subr.mxu0 0.0
        %472 = vmatpush1.msra.mxu0 0.0
        %473 = vmatprep.subr.mxu0 0.0
        %474 = vmatpush1.msra.mxu0 0.0
        %475 = vmatprep.subr.mxu0 0.0
        %476 = vmatpush1.msra.mxu0 0.0
        %477 = vmatprep.subr.mxu0 0.0
        %478 = vmatpush1.msra.mxu0 0.0
        %479 = vmatprep.subr.mxu0 0.0
        %480 = vmatpush1.msra.mxu0 0.0
        %481 = vmatprep.subr.mxu0 0.0
        %482 = vmatpush1.msra.mxu0 0.0
        %483 = vmatprep.subr.mxu0 0.0
        %v484 = vand.u32 %v225, 4294901760
        %485 = vmatpush1.msra.mxu0 %v484
        %486 = vmatprep.subr.mxu0 0.0
        %487 = vmatpush2.msra.mxu0 0.0
        %488 = vmatprep.subr.mxu0 0.0
        %489 = vmatpush2.msra.mxu0 0.0
        %490 = vmatprep.subr.mxu0 0.0
        %491 = vmatpush2.msra.mxu0 0.0
        %492 = vmatprep.subr.mxu0 0.0
        %493 = vmatpush2.msra.mxu0 0.0
        %494 = vmatprep.subr.mxu0 0.0
        %495 = vmatpush2.msra.mxu0 0.0
        %496 = vmatprep.subr.mxu0 0.0
        %497 = vmatpush2.msra.mxu0 0.0
        %498 = vmatprep.subr.mxu0 0.0
        %499 = vmatpush2.msra.mxu0 0.0
        %500 = vmatprep.subr.mxu0 0.0
        %501 = vmatpush2.msra.mxu0 0.0
        %502 = vmatprep.subr.mxu0 0.0
        %503 = vmatpush2.msra.mxu0 0.0
        %504 = vmatprep.subr.mxu0 0.0
        %505 = vmatpush2.msra.mxu0 0.0
        %506 = vmatprep.subr.mxu0 0.0
        %507 = vmatpush2.msra.mxu0 0.0
        %508 = vmatprep.subr.mxu0 0.0
        %509 = vmatpush2.msra.mxu0 0.0
        %510 = vmatprep.subr.mxu0 0.0
        %511 = vmatpush2.msra.mxu0 0.0
        %512 = vmatprep.subr.mxu0 0.0
        %513 = vmatpush2.msra.mxu0 0.0
        %514 = vmatprep.subr.mxu0 0.0
        %515 = vmatpush2.msra.mxu0 0.0
        %516 = vmatprep.subr.mxu0 0.0
        %517 = vmatpush2.msra.mxu0 0.0
        %518 = vmatprep.mubr.f32.mxu0 0.0
        %v519 = vand.u32 %v222, 4294901760
        %v520 = vsub.f32 %v222, %v519
        %v521 = vand.u32 %v520, 4294901760
        %522 = vmatmul.mubr.f32.gmra.mxu0 %v521
        %v523 = vpop.f32.mrf.mxu0
        %v524 = vadd.f32 %v450, %v523
        %v525 = vpop.f32.mrf.mxu0
        %526 = vdwg.mxu0
        %527 = vmatprep.subr.mxu0 0.0
        %528 = vmatpush1.msra.mxu0 0.0
        %529 = vmatprep.subr.mxu0 0.0
        %530 = vmatpush1.msra.mxu0 0.0
        %531 = vmatprep.subr.mxu0 0.0
        %532 = vmatpush1.msra.mxu0 0.0
        %533 = vmatprep.subr.mxu0 0.0
        %534 = vmatpush1.msra.mxu0 0.0
        %535 = vmatprep.subr.mxu0 0.0
        %536 = vmatpush1.msra.mxu0 0.0
        %537 = vmatprep.subr.mxu0 0.0
        %538 = vmatpush1.msra.mxu0 0.0
        %539 = vmatprep.subr.mxu0 0.0
        %540 = vmatpush1.msra.mxu0 0.0
        %541 = vmatprep.subr.mxu0 0.0
        %542 = vmatpush1.msra.mxu0 0.0
        %543 = vmatprep.subr.mxu0 0.0
        %544 = vmatpush1.msra.mxu0 0.0
        %545 = vmatprep.subr.mxu0 0.0
        %546 = vmatpush1.msra.mxu0 0.0
        %547 = vmatprep.subr.mxu0 0.0
        %548 = vmatpush1.msra.mxu0 0.0
        %549 = vmatprep.subr.mxu0 0.0
        %550 = vmatpush1.msra.mxu0 0.0
        %551 = vmatprep.subr.mxu0 0.0
        %552 = vmatpush1.msra.mxu0 0.0
        %553 = vmatprep.subr.mxu0 0.0
        %554 = vmatpush1.msra.mxu0 0.0
        %555 = vmatprep.subr.mxu0 0.0
        %556 = vmatpush1.msra.mxu0 0.0
        %557 = vmatprep.subr.mxu0 0.0
        %v558 = vand.u32 %v225, 4294901760
        %v559 = vsub.f32 %v225, %v558
        %v560 = vand.u32 %v559, 4294901760
        %561 = vmatpush1.msra.mxu0 %v560
        %562 = vmatprep.subr.mxu0 0.0
        %563 = vmatpush2.msra.mxu0 0.0
        %564 = vmatprep.subr.mxu0 0.0
        %565 = vmatpush2.msra.mxu0 0.0
        %566 = vmatprep.subr.mxu0 0.0
        %567 = vmatpush2.msra.mxu0 0.0
        %568 = vmatprep.subr.mxu0 0.0
        %569 = vmatpush2.msra.mxu0 0.0
        %570 = vmatprep.subr.mxu0 0.0
        %571 = vmatpush2.msra.mxu0 0.0
        %572 = vmatprep.subr.mxu0 0.0
        %573 = vmatpush2.msra.mxu0 0.0
        %574 = vmatprep.subr.mxu0 0.0
        %575 = vmatpush2.msra.mxu0 0.0
        %576 = vmatprep.subr.mxu0 0.0
        %577 = vmatpush2.msra.mxu0 0.0
        %578 = vmatprep.subr.mxu0 0.0
        %579 = vmatpush2.msra.mxu0 0.0
        %580 = vmatprep.subr.mxu0 0.0
        %581 = vmatpush2.msra.mxu0 0.0
        %582 = vmatprep.subr.mxu0 0.0
        %583 = vmatpush2.msra.mxu0 0.0
        %584 = vmatprep.subr.mxu0 0.0
        %585 = vmatpush2.msra.mxu0 0.0
        %586 = vmatprep.subr.mxu0 0.0
        %587 = vmatpush2.msra.mxu0 0.0
        %588 = vmatprep.subr.mxu0 0.0
        %589 = vmatpush2.msra.mxu0 0.0
        %590 = vmatprep.subr.mxu0 0.0
        %591 = vmatpush2.msra.mxu0 0.0
        %592 = vmatprep.subr.mxu0 0.0
        %593 = vmatpush2.msra.mxu0 0.0
        %594 = vmatprep.mubr.f32.mxu0 0.0
        %v595 = vand.u32 %v222, 4294901760
        %596 = vmatmul.mubr.f32.gmra.mxu0 %v595
        %v597 = vpop.f32.mrf.mxu0
        %v598 = vadd.f32 %v524, %v597
        %v599 = vpop.f32.mrf.mxu0
        %600 = vdwg.mxu0
        %601 = vmatprep.subr.mxu0 0.0
        %602 = vmatpush1.msra.mxu0 0.0
        %603 = vmatprep.subr.mxu0 0.0
        %604 = vmatpush1.msra.mxu0 0.0
        %605 = vmatprep.subr.mxu0 0.0
        %606 = vmatpush1.msra.mxu0 0.0
        %607 = vmatprep.subr.mxu0 0.0
        %608 = vmatpush1.msra.mxu0 0.0
        %609 = vmatprep.subr.mxu0 0.0
        %610 = vmatpush1.msra.mxu0 0.0
        %611 = vmatprep.subr.mxu0 0.0
        %612 = vmatpush1.msra.mxu0 0.0
        %613 = vmatprep.subr.mxu0 0.0
        %614 = vmatpush1.msra.mxu0 0.0
        %615 = vmatprep.subr.mxu0 0.0
        %616 = vmatpush1.msra.mxu0 0.0
        %617 = vmatprep.subr.mxu0 0.0
        %618 = vmatpush1.msra.mxu0 0.0
        %619 = vmatprep.subr.mxu0 0.0
        %620 = vmatpush1.msra.mxu0 0.0
        %621 = vmatprep.subr.mxu0 0.0
        %622 = vmatpush1.msra.mxu0 0.0
        %623 = vmatprep.subr.mxu0 0.0
        %624 = vmatpush1.msra.mxu0 0.0
        %625 = vmatprep.subr.mxu0 0.0
        %626 = vmatpush1.msra.mxu0 0.0
        %627 = vmatprep.subr.mxu0 0.0
        %628 = vmatpush1.msra.mxu0 0.0
        %629 = vmatprep.subr.mxu0 0.0
        %630 = vmatpush1.msra.mxu0 0.0
        %631 = vmatprep.subr.mxu0 0.0
        %v632 = vand.u32 %v225, 4294901760
        %633 = vmatpush1.msra.mxu0 %v632
        %634 = vmatprep.subr.mxu0 0.0
        %635 = vmatpush2.msra.mxu0 0.0
        %636 = vmatprep.subr.mxu0 0.0
        %637 = vmatpush2.msra.mxu0 0.0
        %638 = vmatprep.subr.mxu0 0.0
        %639 = vmatpush2.msra.mxu0 0.0
        %640 = vmatprep.subr.mxu0 0.0
        %641 = vmatpush2.msra.mxu0 0.0
        %642 = vmatprep.subr.mxu0 0.0
        %643 = vmatpush2.msra.mxu0 0.0
        %644 = vmatprep.subr.mxu0 0.0
        %645 = vmatpush2.msra.mxu0 0.0
        %646 = vmatprep.subr.mxu0 0.0
        %647 = vmatpush2.msra.mxu0 0.0
        %648 = vmatprep.subr.mxu0 0.0
        %649 = vmatpush2.msra.mxu0 0.0
        %650 = vmatprep.subr.mxu0 0.0
        %651 = vmatpush2.msra.mxu0 0.0
        %652 = vmatprep.subr.mxu0 0.0
        %653 = vmatpush2.msra.mxu0 0.0
        %654 = vmatprep.subr.mxu0 0.0
        %655 = vmatpush2.msra.mxu0 0.0
        %656 = vmatprep.subr.mxu0 0.0
        %657 = vmatpush2.msra.mxu0 0.0
        %658 = vmatprep.subr.mxu0 0.0
        %659 = vmatpush2.msra.mxu0 0.0
        %660 = vmatprep.subr.mxu0 0.0
        %661 = vmatpush2.msra.mxu0 0.0
        %662 = vmatprep.subr.mxu0 0.0
        %663 = vmatpush2.msra.mxu0 0.0
        %664 = vmatprep.subr.mxu0 0.0
        %665 = vmatpush2.msra.mxu0 0.0
        %666 = vmatprep.mubr.f32.mxu0 0.0
        %v667 = vand.u32 %v222, 4294901760
        %668 = vmatmul.mubr.f32.gmra.mxu0 %v667
        %v669 = vpop.f32.mrf.mxu0
        %v670 = vadd.f32 %v598, %v669
        %v671 = vpop.f32.mrf.mxu0
        %672 = vdwg.mxu0
        %v674 = vsel %vm209, %v211, 0
        %v676 = vsel %vm224, %v210, 0
        %678 = vmatprep.subr.mxu0 0.0
        %679 = vmatpush1.msra.mxu0 0.0
        %680 = vmatprep.subr.mxu0 0.0
        %681 = vmatpush1.msra.mxu0 0.0
        %682 = vmatprep.subr.mxu0 0.0
        %683 = vmatpush1.msra.mxu0 0.0
        %684 = vmatprep.subr.mxu0 0.0
        %685 = vmatpush1.msra.mxu0 0.0
        %686 = vmatprep.subr.mxu0 0.0
        %687 = vmatpush1.msra.mxu0 0.0
        %688 = vmatprep.subr.mxu0 0.0
        %689 = vmatpush1.msra.mxu0 0.0
        %690 = vmatprep.subr.mxu0 0.0
        %691 = vmatpush1.msra.mxu0 0.0
        %692 = vmatprep.subr.mxu0 0.0
        %693 = vmatpush1.msra.mxu0 0.0
        %694 = vmatprep.subr.mxu0 0.0
        %695 = vmatpush1.msra.mxu0 0.0
        %696 = vmatprep.subr.mxu0 0.0
        %697 = vmatpush1.msra.mxu0 0.0
        %698 = vmatprep.subr.mxu0 0.0
        %699 = vmatpush1.msra.mxu0 0.0
        %700 = vmatprep.subr.mxu0 0.0
        %701 = vmatpush1.msra.mxu0 0.0
        %702 = vmatprep.subr.mxu0 0.0
        %703 = vmatpush1.msra.mxu0 0.0
        %704 = vmatprep.subr.mxu0 0.0
        %705 = vmatpush1.msra.mxu0 0.0
        %706 = vmatprep.subr.mxu0 0.0
        %707 = vmatpush1.msra.mxu0 0.0
        %708 = vmatprep.subr.mxu0 0.0
        %v709 = vand.u32 %v676, 4294901760
        %710 = vmatpush1.msra.mxu0 %v709
        %711 = vmatprep.subr.mxu0 0.0
        %712 = vmatpush2.msra.mxu0 0.0
        %713 = vmatprep.subr.mxu0 0.0
        %714 = vmatpush2.msra.mxu0 0.0
        %715 = vmatprep.subr.mxu0 0.0
        %716 = vmatpush2.msra.mxu0 0.0
        %717 = vmatprep.subr.mxu0 0.0
        %718 = vmatpush2.msra.mxu0 0.0
        %719 = vmatprep.subr.mxu0 0.0
        %720 = vmatpush2.msra.mxu0 0.0
        %721 = vmatprep.subr.mxu0 0.0
        %722 = vmatpush2.msra.mxu0 0.0
        %723 = vmatprep.subr.mxu0 0.0
        %724 = vmatpush2.msra.mxu0 0.0
        %725 = vmatprep.subr.mxu0 0.0
        %726 = vmatpush2.msra.mxu0 0.0
        %727 = vmatprep.subr.mxu0 0.0
        %728 = vmatpush2.msra.mxu0 0.0
        %729 = vmatprep.subr.mxu0 0.0
        %730 = vmatpush2.msra.mxu0 0.0
        %731 = vmatprep.subr.mxu0 0.0
        %732 = vmatpush2.msra.mxu0 0.0
        %733 = vmatprep.subr.mxu0 0.0
        %734 = vmatpush2.msra.mxu0 0.0
        %735 = vmatprep.subr.mxu0 0.0
        %736 = vmatpush2.msra.mxu0 0.0
        %737 = vmatprep.subr.mxu0 0.0
        %738 = vmatpush2.msra.mxu0 0.0
        %739 = vmatprep.subr.mxu0 0.0
        %740 = vmatpush2.msra.mxu0 0.0
        %741 = vmatprep.subr.mxu0 0.0
        %742 = vmatpush2.msra.mxu0 0.0
        %743 = vmatprep.mubr.f32.mxu0 0.0
        %v744 = vand.u32 %v674, 4294901760
        %v745 = vsub.f32 %v674, %v744
        %v746 = vand.u32 %v745, 4294901760
        %v747 = vsub.f32 %v745, %v746
        %v748 = vand.u32 %v747, 4294901760
        %749 = vmatmul.mubr.f32.gmra.mxu0 %v748
        %v750 = vpop.f32.mrf.mxu0
        %v751 = vadd.f32 %v670, %v750
        %v752 = vpop.f32.mrf.mxu0
        %753 = vdwg.mxu0
        %754 = vmatprep.subr.mxu0 0.0
        %755 = vmatpush1.msra.mxu0 0.0
        %756 = vmatprep.subr.mxu0 0.0
        %757 = vmatpush1.msra.mxu0 0.0
        %758 = vmatprep.subr.mxu0 0.0
        %759 = vmatpush1.msra.mxu0 0.0
        %760 = vmatprep.subr.mxu0 0.0
        %761 = vmatpush1.msra.mxu0 0.0
        %762 = vmatprep.subr.mxu0 0.0
        %763 = vmatpush1.msra.mxu0 0.0
        %764 = vmatprep.subr.mxu0 0.0
        %765 = vmatpush1.msra.mxu0 0.0
        %766 = vmatprep.subr.mxu0 0.0
        %767 = vmatpush1.msra.mxu0 0.0
        %768 = vmatprep.subr.mxu0 0.0
        %769 = vmatpush1.msra.mxu0 0.0
        %770 = vmatprep.subr.mxu0 0.0
        %771 = vmatpush1.msra.mxu0 0.0
        %772 = vmatprep.subr.mxu0 0.0
        %773 = vmatpush1.msra.mxu0 0.0
        %774 = vmatprep.subr.mxu0 0.0
        %775 = vmatpush1.msra.mxu0 0.0
        %776 = vmatprep.subr.mxu0 0.0
        %777 = vmatpush1.msra.mxu0 0.0
        %778 = vmatprep.subr.mxu0 0.0
        %779 = vmatpush1.msra.mxu0 0.0
        %780 = vmatprep.subr.mxu0 0.0
        %781 = vmatpush1.msra.mxu0 0.0
        %782 = vmatprep.subr.mxu0 0.0
        %783 = vmatpush1.msra.mxu0 0.0
        %784 = vmatprep.subr.mxu0 0.0
        %v785 = vand.u32 %v676, 4294901760
        %v786 = vsub.f32 %v676, %v785
        %v787 = vand.u32 %v786, 4294901760
        %v788 = vsub.f32 %v786, %v787
        %v789 = vand.u32 %v788, 4294901760
        %790 = vmatpush1.msra.mxu0 %v789
        %791 = vmatprep.subr.mxu0 0.0
        %792 = vmatpush2.msra.mxu0 0.0
        %793 = vmatprep.subr.mxu0 0.0
        %794 = vmatpush2.msra.mxu0 0.0
        %795 = vmatprep.subr.mxu0 0.0
        %796 = vmatpush2.msra.mxu0 0.0
        %797 = vmatprep.subr.mxu0 0.0
        %798 = vmatpush2.msra.mxu0 0.0
        %799 = vmatprep.subr.mxu0 0.0
        %800 = vmatpush2.msra.mxu0 0.0
        %801 = vmatprep.subr.mxu0 0.0
        %802 = vmatpush2.msra.mxu0 0.0
        %803 = vmatprep.subr.mxu0 0.0
        %804 = vmatpush2.msra.mxu0 0.0
        %805 = vmatprep.subr.mxu0 0.0
        %806 = vmatpush2.msra.mxu0 0.0
        %807 = vmatprep.subr.mxu0 0.0
        %808 = vmatpush2.msra.mxu0 0.0
        %809 = vmatprep.subr.mxu0 0.0
        %810 = vmatpush2.msra.mxu0 0.0
        %811 = vmatprep.subr.mxu0 0.0
        %812 = vmatpush2.msra.mxu0 0.0
        %813 = vmatprep.subr.mxu0 0.0
        %814 = vmatpush2.msra.mxu0 0.0
        %815 = vmatprep.subr.mxu0 0.0
        %816 = vmatpush2.msra.mxu0 0.0
        %817 = vmatprep.subr.mxu0 0.0
        %818 = vmatpush2.msra.mxu0 0.0
        %819 = vmatprep.subr.mxu0 0.0
        %820 = vmatpush2.msra.mxu0 0.0
        %821 = vmatprep.subr.mxu0 0.0
        %822 = vmatpush2.msra.mxu0 0.0
        %823 = vmatprep.mubr.f32.mxu0 0.0
        %v824 = vand.u32 %v674, 4294901760
        %825 = vmatmul.mubr.f32.gmra.mxu0 %v824
        %v826 = vpop.f32.mrf.mxu0
        %v827 = vadd.f32 %v751, %v826
        %v828 = vpop.f32.mrf.mxu0
        %829 = vdwg.mxu0
        %830 = vmatprep.subr.mxu0 0.0
        %831 = vmatpush1.msra.mxu0 0.0
        %832 = vmatprep.subr.mxu0 0.0
        %833 = vmatpush1.msra.mxu0 0.0
        %834 = vmatprep.subr.mxu0 0.0
        %835 = vmatpush1.msra.mxu0 0.0
        %836 = vmatprep.subr.mxu0 0.0
        %837 = vmatpush1.msra.mxu0 0.0
        %838 = vmatprep.subr.mxu0 0.0
        %839 = vmatpush1.msra.mxu0 0.0
        %840 = vmatprep.subr.mxu0 0.0
        %841 = vmatpush1.msra.mxu0 0.0
        %842 = vmatprep.subr.mxu0 0.0
        %843 = vmatpush1.msra.mxu0 0.0
        %844 = vmatprep.subr.mxu0 0.0
        %845 = vmatpush1.msra.mxu0 0.0
        %846 = vmatprep.subr.mxu0 0.0
        %847 = vmatpush1.msra.mxu0 0.0
        %848 = vmatprep.subr.mxu0 0.0
        %849 = vmatpush1.msra.mxu0 0.0
        %850 = vmatprep.subr.mxu0 0.0
        %851 = vmatpush1.msra.mxu0 0.0
        %852 = vmatprep.subr.mxu0 0.0
        %853 = vmatpush1.msra.mxu0 0.0
        %854 = vmatprep.subr.mxu0 0.0
        %855 = vmatpush1.msra.mxu0 0.0
        %856 = vmatprep.subr.mxu0 0.0
        %857 = vmatpush1.msra.mxu0 0.0
        %858 = vmatprep.subr.mxu0 0.0
        %859 = vmatpush1.msra.mxu0 0.0
        %860 = vmatprep.subr.mxu0 0.0
        %v861 = vand.u32 %v676, 4294901760
        %v862 = vsub.f32 %v676, %v861
        %863 = vmatpush1.msra.mxu0 %v862
        %864 = vmatprep.subr.mxu0 0.0
        %865 = vmatpush2.msra.mxu0 0.0
        %866 = vmatprep.subr.mxu0 0.0
        %867 = vmatpush2.msra.mxu0 0.0
        %868 = vmatprep.subr.mxu0 0.0
        %869 = vmatpush2.msra.mxu0 0.0
        %870 = vmatprep.subr.mxu0 0.0
        %871 = vmatpush2.msra.mxu0 0.0
        %872 = vmatprep.subr.mxu0 0.0
        %873 = vmatpush2.msra.mxu0 0.0
        %874 = vmatprep.subr.mxu0 0.0
        %875 = vmatpush2.msra.mxu0 0.0
        %876 = vmatprep.subr.mxu0 0.0
        %877 = vmatpush2.msra.mxu0 0.0
        %878 = vmatprep.subr.mxu0 0.0
        %879 = vmatpush2.msra.mxu0 0.0
        %880 = vmatprep.subr.mxu0 0.0
        %881 = vmatpush2.msra.mxu0 0.0
        %882 = vmatprep.subr.mxu0 0.0
        %883 = vmatpush2.msra.mxu0 0.0
        %884 = vmatprep.subr.mxu0 0.0
        %885 = vmatpush2.msra.mxu0 0.0
        %886 = vmatprep.subr.mxu0 0.0
        %887 = vmatpush2.msra.mxu0 0.0
        %888 = vmatprep.subr.mxu0 0.0
        %889 = vmatpush2.msra.mxu0 0.0
        %890 = vmatprep.subr.mxu0 0.0
        %891 = vmatpush2.msra.mxu0 0.0
        %892 = vmatprep.subr.mxu0 0.0
        %893 = vmatpush2.msra.mxu0 0.0
        %894 = vmatprep.subr.mxu0 0.0
        %895 = vmatpush2.msra.mxu0 0.0
        %896 = vmatprep.mubr.f32.mxu0 0.0
        %v897 = vand.u32 %v674, 4294901760
        %v898 = vsub.f32 %v674, %v897
        %899 = vmatmul.mubr.f32.gmra.mxu0 %v898
        %v900 = vpop.f32.mrf.mxu0
        %v901 = vadd.f32 %v827, %v900
        %v902 = vpop.f32.mrf.mxu0
        %903 = vdwg.mxu0
        %904 = vmatprep.subr.mxu0 0.0
        %905 = vmatpush1.msra.mxu0 0.0
        %906 = vmatprep.subr.mxu0 0.0
        %907 = vmatpush1.msra.mxu0 0.0
        %908 = vmatprep.subr.mxu0 0.0
        %909 = vmatpush1.msra.mxu0 0.0
        %910 = vmatprep.subr.mxu0 0.0
        %911 = vmatpush1.msra.mxu0 0.0
        %912 = vmatprep.subr.mxu0 0.0
        %913 = vmatpush1.msra.mxu0 0.0
        %914 = vmatprep.subr.mxu0 0.0
        %915 = vmatpush1.msra.mxu0 0.0
        %916 = vmatprep.subr.mxu0 0.0
        %917 = vmatpush1.msra.mxu0 0.0
        %918 = vmatprep.subr.mxu0 0.0
        %919 = vmatpush1.msra.mxu0 0.0
        %920 = vmatprep.subr.mxu0 0.0
        %921 = vmatpush1.msra.mxu0 0.0
        %922 = vmatprep.subr.mxu0 0.0
        %923 = vmatpush1.msra.mxu0 0.0
        %924 = vmatprep.subr.mxu0 0.0
        %925 = vmatpush1.msra.mxu0 0.0
        %926 = vmatprep.subr.mxu0 0.0
        %927 = vmatpush1.msra.mxu0 0.0
        %928 = vmatprep.subr.mxu0 0.0
        %929 = vmatpush1.msra.mxu0 0.0
        %930 = vmatprep.subr.mxu0 0.0
        %931 = vmatpush1.msra.mxu0 0.0
        %932 = vmatprep.subr.mxu0 0.0
        %933 = vmatpush1.msra.mxu0 0.0
        %934 = vmatprep.subr.mxu0 0.0
        %v935 = vand.u32 %v676, 4294901760
        %936 = vmatpush1.msra.mxu0 %v935
        %937 = vmatprep.subr.mxu0 0.0
        %938 = vmatpush2.msra.mxu0 0.0
        %939 = vmatprep.subr.mxu0 0.0
        %940 = vmatpush2.msra.mxu0 0.0
        %941 = vmatprep.subr.mxu0 0.0
        %942 = vmatpush2.msra.mxu0 0.0
        %943 = vmatprep.subr.mxu0 0.0
        %944 = vmatpush2.msra.mxu0 0.0
        %945 = vmatprep.subr.mxu0 0.0
        %946 = vmatpush2.msra.mxu0 0.0
        %947 = vmatprep.subr.mxu0 0.0
        %948 = vmatpush2.msra.mxu0 0.0
        %949 = vmatprep.subr.mxu0 0.0
        %950 = vmatpush2.msra.mxu0 0.0
        %951 = vmatprep.subr.mxu0 0.0
        %952 = vmatpush2.msra.mxu0 0.0
        %953 = vmatprep.subr.mxu0 0.0
        %954 = vmatpush2.msra.mxu0 0.0
        %955 = vmatprep.subr.mxu0 0.0
        %956 = vmatpush2.msra.mxu0 0.0
        %957 = vmatprep.subr.mxu0 0.0
        %958 = vmatpush2.msra.mxu0 0.0
        %959 = vmatprep.subr.mxu0 0.0
        %960 = vmatpush2.msra.mxu0 0.0
        %961 = vmatprep.subr.mxu0 0.0
        %962 = vmatpush2.msra.mxu0 0.0
        %963 = vmatprep.subr.mxu0 0.0
        %964 = vmatpush2.msra.mxu0 0.0
        %965 = vmatprep.subr.mxu0 0.0
        %966 = vmatpush2.msra.mxu0 0.0
        %967 = vmatprep.subr.mxu0 0.0
        %968 = vmatpush2.msra.mxu0 0.0
        %969 = vmatprep.mubr.f32.mxu0 0.0
        %v970 = vand.u32 %v674, 4294901760
        %v971 = vsub.f32 %v674, %v970
        %v972 = vand.u32 %v971, 4294901760
        %973 = vmatmul.mubr.f32.gmra.mxu0 %v972
        %v974 = vpop.f32.mrf.mxu0
        %v975 = vadd.f32 %v901, %v974
        %v976 = vpop.f32.mrf.mxu0
        %977 = vdwg.mxu0
        %978 = vmatprep.subr.mxu0 0.0
        %979 = vmatpush1.msra.mxu0 0.0
        %980 = vmatprep.subr.mxu0 0.0
        %981 = vmatpush1.msra.mxu0 0.0
        %982 = vmatprep.subr.mxu0 0.0
        %983 = vmatpush1.msra.mxu0 0.0
        %984 = vmatprep.subr.mxu0 0.0
        %985 = vmatpush1.msra.mxu0 0.0
        %986 = vmatprep.subr.mxu0 0.0
        %987 = vmatpush1.msra.mxu0 0.0
        %988 = vmatprep.subr.mxu0 0.0
        %989 = vmatpush1.msra.mxu0 0.0
        %990 = vmatprep.subr.mxu0 0.0
        %991 = vmatpush1.msra.mxu0 0.0
        %992 = vmatprep.subr.mxu0 0.0
        %993 = vmatpush1.msra.mxu0 0.0
        %994 = vmatprep.subr.mxu0 0.0
        %995 = vmatpush1.msra.mxu0 0.0
        %996 = vmatprep.subr.mxu0 0.0
        %997 = vmatpush1.msra.mxu0 0.0
        %998 = vmatprep.subr.mxu0 0.0
        %999 = vmatpush1.msra.mxu0 0.0
        %1000 = vmatprep.subr.mxu0 0.0
        %1001 = vmatpush1.msra.mxu0 0.0
        %1002 = vmatprep.subr.mxu0 0.0
        %1003 = vmatpush1.msra.mxu0 0.0
        %1004 = vmatprep.subr.mxu0 0.0
        %1005 = vmatpush1.msra.mxu0 0.0
        %1006 = vmatprep.subr.mxu0 0.0
        %1007 = vmatpush1.msra.mxu0 0.0
        %1008 = vmatprep.subr.mxu0 0.0
        %v1009 = vand.u32 %v676, 4294901760
        %v1010 = vsub.f32 %v676, %v1009
        %v1011 = vand.u32 %v1010, 4294901760
        %1012 = vmatpush1.msra.mxu0 %v1011
        %1013 = vmatprep.subr.mxu0 0.0
        %1014 = vmatpush2.msra.mxu0 0.0
        %1015 = vmatprep.subr.mxu0 0.0
        %1016 = vmatpush2.msra.mxu0 0.0
        %1017 = vmatprep.subr.mxu0 0.0
        %1018 = vmatpush2.msra.mxu0 0.0
        %1019 = vmatprep.subr.mxu0 0.0
        %1020 = vmatpush2.msra.mxu0 0.0
        %1021 = vmatprep.subr.mxu0 0.0
        %1022 = vmatpush2.msra.mxu0 0.0
        %1023 = vmatprep.subr.mxu0 0.0
        %1024 = vmatpush2.msra.mxu0 0.0
        %1025 = vmatprep.subr.mxu0 0.0
        %1026 = vmatpush2.msra.mxu0 0.0
        %1027 = vmatprep.subr.mxu0 0.0
        %1028 = vmatpush2.msra.mxu0 0.0
        %1029 = vmatprep.subr.mxu0 0.0
        %1030 = vmatpush2.msra.mxu0 0.0
        %1031 = vmatprep.subr.mxu0 0.0
        %1032 = vmatpush2.msra.mxu0 0.0
        %1033 = vmatprep.subr.mxu0 0.0
        %1034 = vmatpush2.msra.mxu0 0.0
        %1035 = vmatprep.subr.mxu0 0.0
        %1036 = vmatpush2.msra.mxu0 0.0
        %1037 = vmatprep.subr.mxu0 0.0
        %1038 = vmatpush2.msra.mxu0 0.0
        %1039 = vmatprep.subr.mxu0 0.0
        %1040 = vmatpush2.msra.mxu0 0.0
        %1041 = vmatprep.subr.mxu0 0.0
        %1042 = vmatpush2.msra.mxu0 0.0
        %1043 = vmatprep.subr.mxu0 0.0
        %1044 = vmatpush2.msra.mxu0 0.0
        %1045 = vmatprep.mubr.f32.mxu0 0.0
        %v1046 = vand.u32 %v674, 4294901760
        %1047 = vmatmul.mubr.f32.gmra.mxu0 %v1046
        %v1048 = vpop.f32.mrf.mxu0
        %v1049 = vadd.f32 %v975, %v1048
        %v1050 = vpop.f32.mrf.mxu0
        %1051 = vdwg.mxu0
        %1052 = vmatprep.subr.mxu0 0.0
        %1053 = vmatpush1.msra.mxu0 0.0
        %1054 = vmatprep.subr.mxu0 0.0
        %1055 = vmatpush1.msra.mxu0 0.0
        %1056 = vmatprep.subr.mxu0 0.0
        %1057 = vmatpush1.msra.mxu0 0.0
        %1058 = vmatprep.subr.mxu0 0.0
        %1059 = vmatpush1.msra.mxu0 0.0
        %1060 = vmatprep.subr.mxu0 0.0
        %1061 = vmatpush1.msra.mxu0 0.0
        %1062 = vmatprep.subr.mxu0 0.0
        %1063 = vmatpush1.msra.mxu0 0.0
        %1064 = vmatprep.subr.mxu0 0.0
        %1065 = vmatpush1.msra.mxu0 0.0
        %1066 = vmatprep.subr.mxu0 0.0
        %1067 = vmatpush1.msra.mxu0 0.0
        %1068 = vmatprep.subr.mxu0 0.0
        %1069 = vmatpush1.msra.mxu0 0.0
        %1070 = vmatprep.subr.mxu0 0.0
        %1071 = vmatpush1.msra.mxu0 0.0
        %1072 = vmatprep.subr.mxu0 0.0
        %1073 = vmatpush1.msra.mxu0 0.0
        %1074 = vmatprep.subr.mxu0 0.0
        %1075 = vmatpush1.msra.mxu0 0.0
        %1076 = vmatprep.subr.mxu0 0.0
        %1077 = vmatpush1.msra.mxu0 0.0
        %1078 = vmatprep.subr.mxu0 0.0
        %1079 = vmatpush1.msra.mxu0 0.0
        %1080 = vmatprep.subr.mxu0 0.0
        %1081 = vmatpush1.msra.mxu0 0.0
        %1082 = vmatprep.subr.mxu0 0.0
        %v1083 = vand.u32 %v676, 4294901760
        %1084 = vmatpush1.msra.mxu0 %v1083
        %1085 = vmatprep.subr.mxu0 0.0
        %1086 = vmatpush2.msra.mxu0 0.0
        %1087 = vmatprep.subr.mxu0 0.0
        %1088 = vmatpush2.msra.mxu0 0.0
        %1089 = vmatprep.subr.mxu0 0.0
        %1090 = vmatpush2.msra.mxu0 0.0
        %1091 = vmatprep.subr.mxu0 0.0
        %1092 = vmatpush2.msra.mxu0 0.0
        %1093 = vmatprep.subr.mxu0 0.0
        %1094 = vmatpush2.msra.mxu0 0.0
        %1095 = vmatprep.subr.mxu0 0.0
        %1096 = vmatpush2.msra.mxu0 0.0
        %1097 = vmatprep.subr.mxu0 0.0
        %1098 = vmatpush2.msra.mxu0 0.0
        %1099 = vmatprep.subr.mxu0 0.0
        %1100 = vmatpush2.msra.mxu0 0.0
        %1101 = vmatprep.subr.mxu0 0.0
        %1102 = vmatpush2.msra.mxu0 0.0
        %1103 = vmatprep.subr.mxu0 0.0
        %1104 = vmatpush2.msra.mxu0 0.0
        %1105 = vmatprep.subr.mxu0 0.0
        %1106 = vmatpush2.msra.mxu0 0.0
        %1107 = vmatprep.subr.mxu0 0.0
        %1108 = vmatpush2.msra.mxu0 0.0
        %1109 = vmatprep.subr.mxu0 0.0
        %1110 = vmatpush2.msra.mxu0 0.0
        %1111 = vmatprep.subr.mxu0 0.0
        %1112 = vmatpush2.msra.mxu0 0.0
        %1113 = vmatprep.subr.mxu0 0.0
        %1114 = vmatpush2.msra.mxu0 0.0
        %1115 = vmatprep.subr.mxu0 0.0
        %1116 = vmatpush2.msra.mxu0 0.0
        %1117 = vmatprep.mubr.f32.mxu0 0.0
        %v1118 = vand.u32 %v674, 4294901760
        %1119 = vmatmul.mubr.f32.gmra.mxu0 %v1118
        %v1120 = vpop.f32.mrf.mxu0
        %v1121 = vadd.f32 %v1049, %v1120
        %v1122 = vpop.f32.mrf.mxu0
        %1123 = vdwg.mxu0
        %s1124 = scalar_lea.vmem %s1, 16
        %v1125 = vld [vmem:[%s1124] sm:$0xff]
        %1126 = vrot.lane.b32.xlu0 %v210, 124
        %v1127 = vpop.permute.xlu0 %1126
        %1128 = vrot.lane.b32.xlu0 %v207, 124
        %v1129 = vpop.permute.xlu0 %1128
        %vm1130 = vcmask 1014784
        %v1131 = vsel %vm1130, %v1127, %v1129
        %v1133 = vsel %vm209, %v1125, 0
        %v1135 = vsel %vm224, %v1131, 0
        %1137 = vmatprep.subr.mxu0 0.0
        %1138 = vmatpush1.msra.mxu0 0.0
        %1139 = vmatprep.subr.mxu0 0.0
        %1140 = vmatpush1.msra.mxu0 0.0
        %1141 = vmatprep.subr.mxu0 0.0
        %1142 = vmatpush1.msra.mxu0 0.0
        %1143 = vmatprep.subr.mxu0 0.0
        %1144 = vmatpush1.msra.mxu0 0.0
        %1145 = vmatprep.subr.mxu0 0.0
        %1146 = vmatpush1.msra.mxu0 0.0
        %1147 = vmatprep.subr.mxu0 0.0
        %1148 = vmatpush1.msra.mxu0 0.0
        %1149 = vmatprep.subr.mxu0 0.0
        %1150 = vmatpush1.msra.mxu0 0.0
        %1151 = vmatprep.subr.mxu0 0.0
        %1152 = vmatpush1.msra.mxu0 0.0
        %1153 = vmatprep.subr.mxu0 0.0
        %1154 = vmatpush1.msra.mxu0 0.0
        %1155 = vmatprep.subr.mxu0 0.0
        %1156 = vmatpush1.msra.mxu0 0.0
        %1157 = vmatprep.subr.mxu0 0.0
        %1158 = vmatpush1.msra.mxu0 0.0
        %1159 = vmatprep.subr.mxu0 0.0
        %1160 = vmatpush1.msra.mxu0 0.0
        %1161 = vmatprep.subr.mxu0 0.0
        %1162 = vmatpush1.msra.mxu0 0.0
        %1163 = vmatprep.subr.mxu0 0.0
        %1164 = vmatpush1.msra.mxu0 0.0
        %1165 = vmatprep.subr.mxu0 0.0
        %1166 = vmatpush1.msra.mxu0 0.0
        %1167 = vmatprep.subr.mxu0 0.0
        %v1168 = vand.u32 %v1135, 4294901760
        %1169 = vmatpush1.msra.mxu0 %v1168
        %1170 = vmatprep.subr.mxu0 0.0
        %1171 = vmatpush2.msra.mxu0 0.0
        %1172 = vmatprep.subr.mxu0 0.0
        %1173 = vmatpush2.msra.mxu0 0.0
        %1174 = vmatprep.subr.mxu0 0.0
        %1175 = vmatpush2.msra.mxu0 0.0
        %1176 = vmatprep.subr.mxu0 0.0
        %1177 = vmatpush2.msra.mxu0 0.0
        %1178 = vmatprep.subr.mxu0 0.0
        %1179 = vmatpush2.msra.mxu0 0.0
        %1180 = vmatprep.subr.mxu0 0.0
        %1181 = vmatpush2.msra.mxu0 0.0
        %1182 = vmatprep.subr.mxu0 0.0
        %1183 = vmatpush2.msra.mxu0 0.0
        %1184 = vmatprep.subr.mxu0 0.0
        %1185 = vmatpush2.msra.mxu0 0.0
        %1186 = vmatprep.subr.mxu0 0.0
        %1187 = vmatpush2.msra.mxu0 0.0
        %1188 = vmatprep.subr.mxu0 0.0
        %1189 = vmatpush2.msra.mxu0 0.0
        %1190 = vmatprep.subr.mxu0 0.0
        %1191 = vmatpush2.msra.mxu0 0.0
        %1192 = vmatprep.subr.mxu0 0.0
        %1193 = vmatpush2.msra.mxu0 0.0
        %1194 = vmatprep.subr.mxu0 0.0
        %1195 = vmatpush2.msra.mxu0 0.0
        %1196 = vmatprep.subr.mxu0 0.0
        %1197 = vmatpush2.msra.mxu0 0.0
        %1198 = vmatprep.subr.mxu0 0.0
        %1199 = vmatpush2.msra.mxu0 0.0
        %1200 = vmatprep.subr.mxu0 0.0
        %1201 = vmatpush2.msra.mxu0 0.0
        %1202 = vmatprep.mubr.f32.mxu0 0.0
        %v1203 = vand.u32 %v1133, 4294901760
        %v1204 = vsub.f32 %v1133, %v1203
        %v1205 = vand.u32 %v1204, 4294901760
        %v1206 = vsub.f32 %v1204, %v1205
        %v1207 = vand.u32 %v1206, 4294901760
        %1208 = vmatmul.mubr.f32.gmra.mxu0 %v1207
        %v1209 = vpop.f32.mrf.mxu0
        %v1210 = vadd.f32 0.0, %v1209
        %v1211 = vpop.f32.mrf.mxu0
        %1212 = vdwg.mxu0
        %1213 = vmatprep.subr.mxu0 0.0
        %1214 = vmatpush1.msra.mxu0 0.0
        %1215 = vmatprep.subr.mxu0 0.0
        %1216 = vmatpush1.msra.mxu0 0.0
        %1217 = vmatprep.subr.mxu0 0.0
        %1218 = vmatpush1.msra.mxu0 0.0
        %1219 = vmatprep.subr.mxu0 0.0
        %1220 = vmatpush1.msra.mxu0 0.0
        %1221 = vmatprep.subr.mxu0 0.0
        %1222 = vmatpush1.msra.mxu0 0.0
        %1223 = vmatprep.subr.mxu0 0.0
        %1224 = vmatpush1.msra.mxu0 0.0
        %1225 = vmatprep.subr.mxu0 0.0
        %1226 = vmatpush1.msra.mxu0 0.0
        %1227 = vmatprep.subr.mxu0 0.0
        %1228 = vmatpush1.msra.mxu0 0.0
        %1229 = vmatprep.subr.mxu0 0.0
        %1230 = vmatpush1.msra.mxu0 0.0
        %1231 = vmatprep.subr.mxu0 0.0
        %1232 = vmatpush1.msra.mxu0 0.0
        %1233 = vmatprep.subr.mxu0 0.0
        %1234 = vmatpush1.msra.mxu0 0.0
        %1235 = vmatprep.subr.mxu0 0.0
        %1236 = vmatpush1.msra.mxu0 0.0
        %1237 = vmatprep.subr.mxu0 0.0
        %1238 = vmatpush1.msra.mxu0 0.0
        %1239 = vmatprep.subr.mxu0 0.0
        %1240 = vmatpush1.msra.mxu0 0.0
        %1241 = vmatprep.subr.mxu0 0.0
        %1242 = vmatpush1.msra.mxu0 0.0
        %1243 = vmatprep.subr.mxu0 0.0
        %v1244 = vand.u32 %v1135, 4294901760
        %v1245 = vsub.f32 %v1135, %v1244
        %v1246 = vand.u32 %v1245, 4294901760
        %v1247 = vsub.f32 %v1245, %v1246
        %v1248 = vand.u32 %v1247, 4294901760
        %1249 = vmatpush1.msra.mxu0 %v1248
        %1250 = vmatprep.subr.mxu0 0.0
        %1251 = vmatpush2.msra.mxu0 0.0
        %1252 = vmatprep.subr.mxu0 0.0
        %1253 = vmatpush2.msra.mxu0 0.0
        %1254 = vmatprep.subr.mxu0 0.0
        %1255 = vmatpush2.msra.mxu0 0.0
        %1256 = vmatprep.subr.mxu0 0.0
        %1257 = vmatpush2.msra.mxu0 0.0
        %1258 = vmatprep.subr.mxu0 0.0
        %1259 = vmatpush2.msra.mxu0 0.0
        %1260 = vmatprep.subr.mxu0 0.0
        %1261 = vmatpush2.msra.mxu0 0.0
        %1262 = vmatprep.subr.mxu0 0.0
        %1263 = vmatpush2.msra.mxu0 0.0
        %1264 = vmatprep.subr.mxu0 0.0
        %1265 = vmatpush2.msra.mxu0 0.0
        %1266 = vmatprep.subr.mxu0 0.0
        %1267 = vmatpush2.msra.mxu0 0.0
        %1268 = vmatprep.subr.mxu0 0.0
        %1269 = vmatpush2.msra.mxu0 0.0
        %1270 = vmatprep.subr.mxu0 0.0
        %1271 = vmatpush2.msra.mxu0 0.0
        %1272 = vmatprep.subr.mxu0 0.0
        %1273 = vmatpush2.msra.mxu0 0.0
        %1274 = vmatprep.subr.mxu0 0.0
        %1275 = vmatpush2.msra.mxu0 0.0
        %1276 = vmatprep.subr.mxu0 0.0
        %1277 = vmatpush2.msra.mxu0 0.0
        %1278 = vmatprep.subr.mxu0 0.0
        %1279 = vmatpush2.msra.mxu0 0.0
        %1280 = vmatprep.subr.mxu0 0.0
        %1281 = vmatpush2.msra.mxu0 0.0
        %1282 = vmatprep.mubr.f32.mxu0 0.0
        %v1283 = vand.u32 %v1133, 4294901760
        %1284 = vmatmul.mubr.f32.gmra.mxu0 %v1283
        %v1285 = vpop.f32.mrf.mxu0
        %v1286 = vadd.f32 %v1210, %v1285
        %v1287 = vpop.f32.mrf.mxu0
        %1288 = vdwg.mxu0
        %1289 = vmatprep.subr.mxu0 0.0
        %1290 = vmatpush1.msra.mxu0 0.0
        %1291 = vmatprep.subr.mxu0 0.0
        %1292 = vmatpush1.msra.mxu0 0.0
        %1293 = vmatprep.subr.mxu0 0.0
        %1294 = vmatpush1.msra.mxu0 0.0
        %1295 = vmatprep.subr.mxu0 0.0
        %1296 = vmatpush1.msra.mxu0 0.0
        %1297 = vmatprep.subr.mxu0 0.0
        %1298 = vmatpush1.msra.mxu0 0.0
        %1299 = vmatprep.subr.mxu0 0.0
        %1300 = vmatpush1.msra.mxu0 0.0
        %1301 = vmatprep.subr.mxu0 0.0
        %1302 = vmatpush1.msra.mxu0 0.0
        %1303 = vmatprep.subr.mxu0 0.0
        %1304 = vmatpush1.msra.mxu0 0.0
        %1305 = vmatprep.subr.mxu0 0.0
        %1306 = vmatpush1.msra.mxu0 0.0
        %1307 = vmatprep.subr.mxu0 0.0
        %1308 = vmatpush1.msra.mxu0 0.0
        %1309 = vmatprep.subr.mxu0 0.0
        %1310 = vmatpush1.msra.mxu0 0.0
        %1311 = vmatprep.subr.mxu0 0.0
        %1312 = vmatpush1.msra.mxu0 0.0
        %1313 = vmatprep.subr.mxu0 0.0
        %1314 = vmatpush1.msra.mxu0 0.0
        %1315 = vmatprep.subr.mxu0 0.0
        %1316 = vmatpush1.msra.mxu0 0.0
        %1317 = vmatprep.subr.mxu0 0.0
        %1318 = vmatpush1.msra.mxu0 0.0
        %1319 = vmatprep.subr.mxu0 0.0
        %v1320 = vand.u32 %v1135, 4294901760
        %v1321 = vsub.f32 %v1135, %v1320
        %1322 = vmatpush1.msra.mxu0 %v1321
        %1323 = vmatprep.subr.mxu0 0.0
        %1324 = vmatpush2.msra.mxu0 0.0
        %1325 = vmatprep.subr.mxu0 0.0
        %1326 = vmatpush2.msra.mxu0 0.0
        %1327 = vmatprep.subr.mxu0 0.0
        %1328 = vmatpush2.msra.mxu0 0.0
        %1329 = vmatprep.subr.mxu0 0.0
        %1330 = vmatpush2.msra.mxu0 0.0
        %1331 = vmatprep.subr.mxu0 0.0
        %1332 = vmatpush2.msra.mxu0 0.0
        %1333 = vmatprep.subr.mxu0 0.0
        %1334 = vmatpush2.msra.mxu0 0.0
        %1335 = vmatprep.subr.mxu0 0.0
        %1336 = vmatpush2.msra.mxu0 0.0
        %1337 = vmatprep.subr.mxu0 0.0
        %1338 = vmatpush2.msra.mxu0 0.0
        %1339 = vmatprep.subr.mxu0 0.0
        %1340 = vmatpush2.msra.mxu0 0.0
        %1341 = vmatprep.subr.mxu0 0.0
        %1342 = vmatpush2.msra.mxu0 0.0
        %1343 = vmatprep.subr.mxu0 0.0
        %1344 = vmatpush2.msra.mxu0 0.0
        %1345 = vmatprep.subr.mxu0 0.0
        %1346 = vmatpush2.msra.mxu0 0.0
        %1347 = vmatprep.subr.mxu0 0.0
        %1348 = vmatpush2.msra.mxu0 0.0
        %1349 = vmatprep.subr.mxu0 0.0
        %1350 = vmatpush2.msra.mxu0 0.0
        %1351 = vmatprep.subr.mxu0 0.0
        %1352 = vmatpush2.msra.mxu0 0.0
        %1353 = vmatprep.subr.mxu0 0.0
        %1354 = vmatpush2.msra.mxu0 0.0
        %1355 = vmatprep.mubr.f32.mxu0 0.0
        %v1356 = vand.u32 %v1133, 4294901760
        %v1357 = vsub.f32 %v1133, %v1356
        %1358 = vmatmul.mubr.f32.gmra.mxu0 %v1357
        %v1359 = vpop.f32.mrf.mxu0
        %v1360 = vadd.f32 %v1286, %v1359
        %v1361 = vpop.f32.mrf.mxu0
        %1362 = vdwg.mxu0
        %1363 = vmatprep.subr.mxu0 0.0
        %1364 = vmatpush1.msra.mxu0 0.0
        %1365 = vmatprep.subr.mxu0 0.0
        %1366 = vmatpush1.msra.mxu0 0.0
        %1367 = vmatprep.subr.mxu0 0.0
        %1368 = vmatpush1.msra.mxu0 0.0
        %1369 = vmatprep.subr.mxu0 0.0
        %1370 = vmatpush1.msra.mxu0 0.0
        %1371 = vmatprep.subr.mxu0 0.0
        %1372 = vmatpush1.msra.mxu0 0.0
        %1373 = vmatprep.subr.mxu0 0.0
        %1374 = vmatpush1.msra.mxu0 0.0
        %1375 = vmatprep.subr.mxu0 0.0
        %1376 = vmatpush1.msra.mxu0 0.0
        %1377 = vmatprep.subr.mxu0 0.0
        %1378 = vmatpush1.msra.mxu0 0.0
        %1379 = vmatprep.subr.mxu0 0.0
        %1380 = vmatpush1.msra.mxu0 0.0
        %1381 = vmatprep.subr.mxu0 0.0
        %1382 = vmatpush1.msra.mxu0 0.0
        %1383 = vmatprep.subr.mxu0 0.0
        %1384 = vmatpush1.msra.mxu0 0.0
        %1385 = vmatprep.subr.mxu0 0.0
        %1386 = vmatpush1.msra.mxu0 0.0
        %1387 = vmatprep.subr.mxu0 0.0
        %1388 = vmatpush1.msra.mxu0 0.0
        %1389 = vmatprep.subr.mxu0 0.0
        %1390 = vmatpush1.msra.mxu0 0.0
        %1391 = vmatprep.subr.mxu0 0.0
        %1392 = vmatpush1.msra.mxu0 0.0
        %1393 = vmatprep.subr.mxu0 0.0
        %v1394 = vand.u32 %v1135, 4294901760
        %1395 = vmatpush1.msra.mxu0 %v1394
        %1396 = vmatprep.subr.mxu0 0.0
        %1397 = vmatpush2.msra.mxu0 0.0
        %1398 = vmatprep.subr.mxu0 0.0
        %1399 = vmatpush2.msra.mxu0 0.0
        %1400 = vmatprep.subr.mxu0 0.0
        %1401 = vmatpush2.msra.mxu0 0.0
        %1402 = vmatprep.subr.mxu0 0.0
        %1403 = vmatpush2.msra.mxu0 0.0
        %1404 = vmatprep.subr.mxu0 0.0
        %1405 = vmatpush2.msra.mxu0 0.0
        %1406 = vmatprep.subr.mxu0 0.0
        %1407 = vmatpush2.msra.mxu0 0.0
        %1408 = vmatprep.subr.mxu0 0.0
        %1409 = vmatpush2.msra.mxu0 0.0
        %1410 = vmatprep.subr.mxu0 0.0
        %1411 = vmatpush2.msra.mxu0 0.0
        %1412 = vmatprep.subr.mxu0 0.0
        %1413 = vmatpush2.msra.mxu0 0.0
        %1414 = vmatprep.subr.mxu0 0.0
        %1415 = vmatpush2.msra.mxu0 0.0
        %1416 = vmatprep.subr.mxu0 0.0
        %1417 = vmatpush2.msra.mxu0 0.0
        %1418 = vmatprep.subr.mxu0 0.0
        %1419 = vmatpush2.msra.mxu0 0.0
        %1420 = vmatprep.subr.mxu0 0.0
        %1421 = vmatpush2.msra.mxu0 0.0
        %1422 = vmatprep.subr.mxu0 0.0
        %1423 = vmatpush2.msra.mxu0 0.0
        %1424 = vmatprep.subr.mxu0 0.0
        %1425 = vmatpush2.msra.mxu0 0.0
        %1426 = vmatprep.subr.mxu0 0.0
        %1427 = vmatpush2.msra.mxu0 0.0
        %1428 = vmatprep.mubr.f32.mxu0 0.0
        %v1429 = vand.u32 %v1133, 4294901760
        %v1430 = vsub.f32 %v1133, %v1429
        %v1431 = vand.u32 %v1430, 4294901760
        %1432 = vmatmul.mubr.f32.gmra.mxu0 %v1431
        %v1433 = vpop.f32.mrf.mxu0
        %v1434 = vadd.f32 %v1360, %v1433
        %v1435 = vpop.f32.mrf.mxu0
        %1436 = vdwg.mxu0
        %1437 = vmatprep.subr.mxu0 0.0
        %1438 = vmatpush1.msra.mxu0 0.0
        %1439 = vmatprep.subr.mxu0 0.0
        %1440 = vmatpush1.msra.mxu0 0.0
        %1441 = vmatprep.subr.mxu0 0.0
        %1442 = vmatpush1.msra.mxu0 0.0
        %1443 = vmatprep.subr.mxu0 0.0
        %1444 = vmatpush1.msra.mxu0 0.0
        %1445 = vmatprep.subr.mxu0 0.0
        %1446 = vmatpush1.msra.mxu0 0.0
        %1447 = vmatprep.subr.mxu0 0.0
        %1448 = vmatpush1.msra.mxu0 0.0
        %1449 = vmatprep.subr.mxu0 0.0
        %1450 = vmatpush1.msra.mxu0 0.0
        %1451 = vmatprep.subr.mxu0 0.0
        %1452 = vmatpush1.msra.mxu0 0.0
        %1453 = vmatprep.subr.mxu0 0.0
        %1454 = vmatpush1.msra.mxu0 0.0
        %1455 = vmatprep.subr.mxu0 0.0
        %1456 = vmatpush1.msra.mxu0 0.0
        %1457 = vmatprep.subr.mxu0 0.0
        %1458 = vmatpush1.msra.mxu0 0.0
        %1459 = vmatprep.subr.mxu0 0.0
        %1460 = vmatpush1.msra.mxu0 0.0
        %1461 = vmatprep.subr.mxu0 0.0
        %1462 = vmatpush1.msra.mxu0 0.0
        %1463 = vmatprep.subr.mxu0 0.0
        %1464 = vmatpush1.msra.mxu0 0.0
        %1465 = vmatprep.subr.mxu0 0.0
        %1466 = vmatpush1.msra.mxu0 0.0
        %1467 = vmatprep.subr.mxu0 0.0
        %v1468 = vand.u32 %v1135, 4294901760
        %v1469 = vsub.f32 %v1135, %v1468
        %v1470 = vand.u32 %v1469, 4294901760
        %1471 = vmatpush1.msra.mxu0 %v1470
        %1472 = vmatprep.subr.mxu0 0.0
        %1473 = vmatpush2.msra.mxu0 0.0
        %1474 = vmatprep.subr.mxu0 0.0
        %1475 = vmatpush2.msra.mxu0 0.0
        %1476 = vmatprep.subr.mxu0 0.0
        %1477 = vmatpush2.msra.mxu0 0.0
        %1478 = vmatprep.subr.mxu0 0.0
        %1479 = vmatpush2.msra.mxu0 0.0
        %1480 = vmatprep.subr.mxu0 0.0
        %1481 = vmatpush2.msra.mxu0 0.0
        %1482 = vmatprep.subr.mxu0 0.0
        %1483 = vmatpush2.msra.mxu0 0.0
        %1484 = vmatprep.subr.mxu0 0.0
        %1485 = vmatpush2.msra.mxu0 0.0
        %1486 = vmatprep.subr.mxu0 0.0
        %1487 = vmatpush2.msra.mxu0 0.0
        %1488 = vmatprep.subr.mxu0 0.0
        %1489 = vmatpush2.msra.mxu0 0.0
        %1490 = vmatprep.subr.mxu0 0.0
        %1491 = vmatpush2.msra.mxu0 0.0
        %1492 = vmatprep.subr.mxu0 0.0
        %1493 = vmatpush2.msra.mxu0 0.0
        %1494 = vmatprep.subr.mxu0 0.0
        %1495 = vmatpush2.msra.mxu0 0.0
        %1496 = vmatprep.subr.mxu0 0.0
        %1497 = vmatpush2.msra.mxu0 0.0
        %1498 = vmatprep.subr.mxu0 0.0
        %1499 = vmatpush2.msra.mxu0 0.0
        %1500 = vmatprep.subr.mxu0 0.0
        %1501 = vmatpush2.msra.mxu0 0.0
        %1502 = vmatprep.subr.mxu0 0.0
        %1503 = vmatpush2.msra.mxu0 0.0
        %1504 = vmatprep.mubr.f32.mxu0 0.0
        %v1505 = vand.u32 %v1133, 4294901760
        %1506 = vmatmul.mubr.f32.gmra.mxu0 %v1505
        %v1507 = vpop.f32.mrf.mxu0
        %v1508 = vadd.f32 %v1434, %v1507
        %v1509 = vpop.f32.mrf.mxu0
        %1510 = vdwg.mxu0
        %1511 = vmatprep.subr.mxu0 0.0
        %1512 = vmatpush1.msra.mxu0 0.0
        %1513 = vmatprep.subr.mxu0 0.0
        %1514 = vmatpush1.msra.mxu0 0.0
        %1515 = vmatprep.subr.mxu0 0.0
        %1516 = vmatpush1.msra.mxu0 0.0
        %1517 = vmatprep.subr.mxu0 0.0
        %1518 = vmatpush1.msra.mxu0 0.0
        %1519 = vmatprep.subr.mxu0 0.0
        %1520 = vmatpush1.msra.mxu0 0.0
        %1521 = vmatprep.subr.mxu0 0.0
        %1522 = vmatpush1.msra.mxu0 0.0
        %1523 = vmatprep.subr.mxu0 0.0
        %1524 = vmatpush1.msra.mxu0 0.0
        %1525 = vmatprep.subr.mxu0 0.0
        %1526 = vmatpush1.msra.mxu0 0.0
        %1527 = vmatprep.subr.mxu0 0.0
        %1528 = vmatpush1.msra.mxu0 0.0
        %1529 = vmatprep.subr.mxu0 0.0
        %1530 = vmatpush1.msra.mxu0 0.0
        %1531 = vmatprep.subr.mxu0 0.0
        %1532 = vmatpush1.msra.mxu0 0.0
        %1533 = vmatprep.subr.mxu0 0.0
        %1534 = vmatpush1.msra.mxu0 0.0
        %1535 = vmatprep.subr.mxu0 0.0
        %1536 = vmatpush1.msra.mxu0 0.0
        %1537 = vmatprep.subr.mxu0 0.0
        %1538 = vmatpush1.msra.mxu0 0.0
        %1539 = vmatprep.subr.mxu0 0.0
        %1540 = vmatpush1.msra.mxu0 0.0
        %1541 = vmatprep.subr.mxu0 0.0
        %v1542 = vand.u32 %v1135, 4294901760
        %1543 = vmatpush1.msra.mxu0 %v1542
        %1544 = vmatprep.subr.mxu0 0.0
        %1545 = vmatpush2.msra.mxu0 0.0
        %1546 = vmatprep.subr.mxu0 0.0
        %1547 = vmatpush2.msra.mxu0 0.0
        %1548 = vmatprep.subr.mxu0 0.0
        %1549 = vmatpush2.msra.mxu0 0.0
        %1550 = vmatprep.subr.mxu0 0.0
        %1551 = vmatpush2.msra.mxu0 0.0
        %1552 = vmatprep.subr.mxu0 0.0
        %1553 = vmatpush2.msra.mxu0 0.0
        %1554 = vmatprep.subr.mxu0 0.0
        %1555 = vmatpush2.msra.mxu0 0.0
        %1556 = vmatprep.subr.mxu0 0.0
        %1557 = vmatpush2.msra.mxu0 0.0
        %1558 = vmatprep.subr.mxu0 0.0
        %1559 = vmatpush2.msra.mxu0 0.0
        %1560 = vmatprep.subr.mxu0 0.0
        %1561 = vmatpush2.msra.mxu0 0.0
        %1562 = vmatprep.subr.mxu0 0.0
        %1563 = vmatpush2.msra.mxu0 0.0
        %1564 = vmatprep.subr.mxu0 0.0
        %1565 = vmatpush2.msra.mxu0 0.0
        %1566 = vmatprep.subr.mxu0 0.0
        %1567 = vmatpush2.msra.mxu0 0.0
        %1568 = vmatprep.subr.mxu0 0.0
        %1569 = vmatpush2.msra.mxu0 0.0
        %1570 = vmatprep.subr.mxu0 0.0
        %1571 = vmatpush2.msra.mxu0 0.0
        %1572 = vmatprep.subr.mxu0 0.0
        %1573 = vmatpush2.msra.mxu0 0.0
        %1574 = vmatprep.subr.mxu0 0.0
        %1575 = vmatpush2.msra.mxu0 0.0
        %1576 = vmatprep.mubr.f32.mxu0 0.0
        %v1577 = vand.u32 %v1133, 4294901760
        %1578 = vmatmul.mubr.f32.gmra.mxu0 %v1577
        %v1579 = vpop.f32.mrf.mxu0
        %v1580 = vadd.f32 %v1508, %v1579
        %v1581 = vpop.f32.mrf.mxu0
        %1582 = vdwg.mxu0
        %v1583 = vadd.f32 %v1121, %v1580
        %v1584 = vld [vmem:[%s2] sm:$0xff]
        %1586 = vset.pattern.permute.xlu0 0
        %1587 = vperm.xlu0 %1586, %v1584
        %v1588 = vpop.permute.xlu0 %1587
        %v1590 = vadd.f32 %v1583, %v1588
        %1591 = vst [vmem:[%s185] sm:$0xff] %v1590
        %1592 = vst [vmem:[#allocation2] sm:$0xf] %v194
        %s1593 = sand.u32 %s109, 1
        %s1594 = scalar_lea.sflag [#allocation4], %s1593
        %s1595 = sand.u32 %s109, 1
        %s1596 = smul.addr %s1595, 8
        %s1597 = scalar_lea.vmem [#allocation3], %s1596
        // Predicated region
        $region37: #{tpu_custom_call.1} parent=31 // pred_check
          %p1598 = pneg %p119
        $region38: #{tpu_custom_call.1} parent=31 // pred_check_branch
          %1600 = sbr.rel (%p1598) target = $region40
        $region39: #{tpu_custom_call.1} parent=31 // pred_region
          %s1602 = ssub.s32 128, 128
          %1603 = vsyncadd %s1594, %s1602
          %s1604 = smul.addr %s21, 3
          %s1605 = sadd.s32 %s22, %s1604
          %s1606 = smul.addr %s1605, 128
          %s1607 = scalar_lea.hbm %s3, %s1606
          %s1609 = sshll.u32 %s1597, 4
          %s1610 = int_to_ptr.vmem [resolvable:$true] %s1609
          %1612 = dma.vmem_to_hbm [thread:$0]  %s1610, 128, %s1607, %s1594
        $region40: #{tpu_custom_call.1} parent=31 // pred_fallthru
          _
      $region32: #{tpu_custom_call.1} parent=5 // pred_fallthru
        _
      %p1613 = scmp.le.s32.totalorder 2, %s12
      // Predicated region
      $region41: #{tpu_custom_call.1} parent=5 // pred_check
        %p1614 = pneg %p1613
      $region42: #{tpu_custom_call.1} parent=5 // pred_check_branch
        %1616 = sbr.rel (%p1614) target = $region44
      $region43: #{tpu_custom_call.1} parent=5 // pred_region
        %s1617 = ssub.s32 %s12, 2
        // Predicated region
        $region45: #{tpu_custom_call.1} parent=43 // pred_check
          %p1618 = pneg %p125
        $region46: #{tpu_custom_call.1} parent=43 // pred_check_branch
          %1620 = sbr.rel (%p1618) target = $region48
        $region47: #{tpu_custom_call.1} parent=43 // pred_region
          %s1621 = sand.u32 %s110, 1
          %s1622 = scalar_lea.sflag [#allocation4], %s1621
          %s1623 = sand.u32 %s110, 1
          %s1624 = smul.addr %s1623, 8
          %s1625 = scalar_lea.vmem [#allocation3], %s1624
          %1626 = dma.done %s1622, 128
        $region48: #{tpu_custom_call.1} parent=43 // pred_fallthru
          _
      $region44: #{tpu_custom_call.1} parent=5 // pred_fallthru
        _
    $region6: #{tpu_custom_call.1} parent=1 // loop_footer
      %s16 = sadd.s32 1, %s12
    $region7: #{tpu_custom_call.1} parent=1 // loop_footer_branch
      %11 = sbr.rel target = $region3
    $region8: #{tpu_custom_call.1} parent=1 // loop_exit
      _
    %1627 = vsyncpa [#allocation4], 1
    %s1628 = scalar_lea.sflag [#allocation4], 1
    %1629 = vsyncpa %s1628, 1

</llo_original>
